<compile_context>
chip_gen: v6e
topology: v6e:2x2x1
jax: 0.10.0
libtpu: 0.0.40
codegen_flags: <defaults>
</compile_context>

<pallas_src>
import jax
import jax.numpy as jnp
from jax import lax
from jax.experimental import pallas as pl
from jax.experimental.pallas import tpu as pltpu

NEGATIVE_SLOPE = -2.8388
C_IN, C_OUT, KSZ = 10, 10, 7
H_IN = W_IN = 6
H_CT = W_CT = H_IN + KSZ - 1          # 12 : conv-transpose output spatial
H_OUT = W_OUT = H_CT - 3 + 1          # 10 : after 3x3/stride-1 max pool
H_PADIN = H_IN + 2 * (KSZ - 1)        # 18 : zero-padded input spatial
R_ROWS = 24                           # 18 padded to a multiple of 8 (sublane-tile aligned)
CT_ROWS = 16                          # 12 padded to a multiple of 8
K_RAW = H_PADIN * C_IN                # 180 : one padded input row, (x_in, ci) flattened
K_PAD = 256                           # contraction dim padded to 2 lane tiles
N_LANES = 128                         # output lanes per tap: (x_out*10+co) = 120 -> 128
GRID = 2                              # 2 parallel grid steps (v7x megacore), 11 batches each


def fused_convt_pool_kernel(r_ref, w_ref, b_ref, o_ref):
    # r_ref: (NB*R_ROWS, K_PAD)   rows = (batch, padded-input-row h), lanes = x_in*10+ci
    # w_ref: (K_PAD, KSZ*N_LANES) block-Toeplitz weight, cols = (a, x_out*10+co)
    # b_ref: (1, N_LANES)         bias broadcast over (x_out, co) lanes
    # o_ref: (NB, H_OUT, W_OUT*C_OUT)
    nb = o_ref.shape[0]

    # One big MXU matmul: every padded input row against all 7 vertical taps at once.
    p = jnp.dot(r_ref[...], w_ref[...], preferred_element_type=jnp.float32)  # (NB*24, 896)
    p = p.reshape(nb, R_ROWS, KSZ * N_LANES)          # tile-aligned split (24 % 8 == 0)

    # Combine the 7 vertical taps with sublane-shifted adds (XLU/VPU, data stays in VMEM).
    v = None
    for a in range(KSZ):
        part = p[:, a:a + CT_ROWS, a * N_LANES:(a + 1) * N_LANES]   # (NB, 16, 128)
        v = part if v is None else v + part
    v = v + b_ref[...]            # rows >= 12 of each batch are unused padding

    # Fused 3x3 stride-1 max pool + where(v>0, v, v*negative_slope).
    m = None
    for dy in range(3):
        rows = v[:, dy:dy + H_OUT, :]
        for dx in range(3):
            cand = rows[:, :, dx * C_OUT: dx * C_OUT + W_OUT * C_OUT]   # (NB, 10, 100)
            m = cand if m is None else jnp.maximum(m, cand)
    o_ref[...] = jnp.where(m > 0, m, m * NEGATIVE_SLOPE)


@jax.jit
def model_forward(x, weight, bias):
    """x: (N,10,6,6) NCHW; weight: (Cin,Cout,7,7) [PyTorch ConvTranspose2d layout]; bias: (10,)."""
    n = x.shape[0]
    nb = -(-n // GRID)                 # batches per grid step
    n_pad = nb * GRID

    # ---- tiny wrapper glue (input is ~32 KiB): NCHW -> zero-padded row slab ----
    # r[n*24 + h, x_in*10 + ci] = zero-padded input; rows 18->24 and lanes 180->256 padded.
    x_rows = jnp.transpose(x, (0, 2, 3, 1)).reshape(n, H_IN, W_IN * C_IN)
    r = jnp.pad(x_rows, ((0, n_pad - n),
                         (KSZ - 1, R_ROWS - H_IN - (KSZ - 1)),
                         ((KSZ - 1) * C_IN, K_PAD - (KSZ - 1) * C_IN - W_IN * C_IN)))
    r = r.reshape(n_pad * R_ROWS, K_PAD).astype(jnp.float32)

    # ---- block-Toeplitz weight: conv-transpose == full correlation with flipped kernel ----
    # out[co,y,x] = bias[co] + sum_{a,b,ci} xpad[y+a, x+b, ci] * wf[a,b,ci,co]
    wf = jnp.transpose(weight[:, :, ::-1, ::-1], (2, 3, 0, 1))       # (a, b, ci, co)
    xi = jnp.arange(H_PADIN)
    xo = jnp.arange(W_CT)
    bsh = xi[:, None] - xo[None, :]                                  # (18, 12)
    valid = (bsh >= 0) & (bsh < KSZ)
    wg = wf[:, jnp.clip(bsh, 0, KSZ - 1)]                            # (7, 18, 12, 10, 10)
    wg = jnp.where(valid[None, :, :, None, None], wg, 0.0)
    wbig = jnp.transpose(wg, (0, 1, 3, 2, 4)).reshape(KSZ, K_RAW, W_CT * C_OUT)
    wbig = jnp.pad(wbig, ((0, 0), (0, K_PAD - K_RAW), (0, N_LANES - W_CT * C_OUT)))
    wcat = jnp.transpose(wbig, (1, 0, 2)).reshape(K_PAD, KSZ * N_LANES).astype(jnp.float32)

    bias_row = jnp.pad(jnp.tile(bias, W_CT), (0, N_LANES - W_CT * C_OUT))
    bias_row = bias_row.reshape(1, N_LANES).astype(jnp.float32)

    out = pl.pallas_call(
        fused_convt_pool_kernel,
        out_shape=jax.ShapeDtypeStruct((n_pad, H_OUT, W_OUT * C_OUT), jnp.float32),
        grid=(GRID,),
        in_specs=[
            pl.BlockSpec((nb * R_ROWS, K_PAD), lambda i: (i, 0)),
            pl.BlockSpec((K_PAD, KSZ * N_LANES), lambda i: (0, 0)),
            pl.BlockSpec((1, N_LANES), lambda i: (0, 0)),
        ],
        out_specs=pl.BlockSpec((nb, H_OUT, W_OUT * C_OUT), lambda i: (i, 0, 0)),
        compiler_params=pltpu.CompilerParams(dimension_semantics=("parallel",)),
    )(r, wcat, bias_row)

    # kernel output layout [n, y, x*10+co]  ->  NCHW (88 KiB wrapper transpose)
    out = out[:n].reshape(n, H_OUT, W_OUT, C_OUT)
    return jnp.transpose(out, (0, 3, 1, 2))


def reference_forward(x, weight, bias):
    """Pure-JAX reference of the PyTorch module."""
    wflip = weight[:, :, ::-1, ::-1]
    wt = jnp.transpose(wflip, (1, 0, 2, 3))                          # (Cout, Cin, a, b)
    v1 = lax.conv_general_dilated(
        x, wt, window_strides=(1, 1),
        padding=((KSZ - 1, KSZ - 1), (KSZ - 1, KSZ - 1)),
        dimension_numbers=("NCHW", "OIHW", "NCHW"),
        precision=lax.Precision.HIGHEST,
    ) + bias.reshape(1, C_OUT, 1, 1)
    v4 = lax.reduce_window(v1, -jnp.inf, lax.max, (1, 1, 3, 3), (1, 1, 1, 1), "VALID")
    return jnp.where(v4 > 0, v4, v4 * NEGATIVE_SLOPE)


if __name__ == "__main__":
    key = jax.random.PRNGKey(0)
    k1, k2, k3 = jax.random.split(key, 3)
    batch = 22
    x = jax.random.normal(k1, (batch, C_IN, H_IN, W_IN), jnp.float32)
    bound = 1.0 / (C_IN * KSZ * KSZ) ** 0.5
    weight = jax.random.uniform(k2, (C_IN, C_OUT, KSZ, KSZ), jnp.float32, -bound, bound)
    bias = jax.random.uniform(k3, (C_OUT,), jnp.float32, -bound, bound)

    out = jax.block_until_ready(model_forward(x, weight, bias))
    ref = reference_forward(x, weight, bias)
    assert out.shape == (batch, C_OUT, H_OUT, W_OUT), out.shape
    if not jnp.allclose(out, ref, atol=5e-3, rtol=5e-3):
        raise SystemExit("kernel result mismatch vs reference")
    print("KERNEL_OK")
</pallas_src>

<mosaic_0001>
module attributes {stable_mosaic.version = 11 : i64} {
  func.func @fused_convt_pool_kernel(%arg0: i32, %arg1: memref<264x256xf32, #tpu.memory_space<vmem>>, %arg2: memref<256x896xf32, #tpu.memory_space<vmem>>, %arg3: memref<1x128xf32, #tpu.memory_space<vmem>>, %arg4: memref<11x10x100xf32, #tpu.memory_space<vmem>>) attributes {dimension_semantics = [#tpu.dimension_semantics<parallel>], iteration_bounds = array<i64: 2>, scalar_prefetch = 0 : i64, scratch_operands = 0 : i64, tpu.core_type = #tpu.core_type<tc>, window_params = [{transform_indices = @transform_0, window_bounds = array<i64: 264, 256>}, {pipeline_mode = #tpu.pipeline_mode<synchronous>, transform_indices = @transform_1, window_bounds = array<i64: 256, 896>}, {pipeline_mode = #tpu.pipeline_mode<synchronous>, transform_indices = @transform_2, window_bounds = array<i64: 1, 128>}, {transform_indices = @transform_3, window_bounds = array<i64: 11, 10, 100>}]} {
    %c0 = arith.constant 0 : index
    %c0_0 = arith.constant 0 : index
    %0 = vector.load %arg1[%c0, %c0_0] : memref<264x256xf32, #tpu.memory_space<vmem>>, vector<264x256xf32>
    %c0_1 = arith.constant 0 : index
    %c0_2 = arith.constant 0 : index
    %1 = vector.load %arg2[%c0_1, %c0_2] : memref<256x896xf32, #tpu.memory_space<vmem>>, vector<256x896xf32>
    %cst = arith.constant dense<0.000000e+00> : vector<264x896xf32>
    %2 = tpu.matmul %0, %1, %cst {dimension_numbers = #tpu.dot_dimension_numbers<[1], [0], [0], [1], [0, 0, 1, 1], [], []>} : vector<264x256xf32>, vector<256x896xf32>, vector<264x896xf32> -> vector<264x896xf32>
    %3 = vector.shape_cast %2 : vector<264x896xf32> to vector<11x24x896xf32>
    %4 = vector.extract_strided_slice %3 {offsets = [0, 0, 0], sizes = [11, 16, 128], strides = [1, 1, 1]} : vector<11x24x896xf32> to vector<11x16x128xf32>
    %5 = vector.extract_strided_slice %3 {offsets = [0, 1, 128], sizes = [11, 16, 128], strides = [1, 1, 1]} : vector<11x24x896xf32> to vector<11x16x128xf32>
    %6 = arith.addf %4, %5 : vector<11x16x128xf32>
    %7 = vector.extract_strided_slice %3 {offsets = [0, 2, 256], sizes = [11, 16, 128], strides = [1, 1, 1]} : vector<11x24x896xf32> to vector<11x16x128xf32>
    %8 = arith.addf %6, %7 : vector<11x16x128xf32>
    %9 = vector.extract_strided_slice %3 {offsets = [0, 3, 384], sizes = [11, 16, 128], strides = [1, 1, 1]} : vector<11x24x896xf32> to vector<11x16x128xf32>
    %10 = arith.addf %8, %9 : vector<11x16x128xf32>
    %11 = vector.extract_strided_slice %3 {offsets = [0, 4, 512], sizes = [11, 16, 128], strides = [1, 1, 1]} : vector<11x24x896xf32> to vector<11x16x128xf32>
    %12 = arith.addf %10, %11 : vector<11x16x128xf32>
    %13 = vector.extract_strided_slice %3 {offsets = [0, 5, 640], sizes = [11, 16, 128], strides = [1, 1, 1]} : vector<11x24x896xf32> to vector<11x16x128xf32>
    %14 = arith.addf %12, %13 : vector<11x16x128xf32>
    %15 = vector.extract_strided_slice %3 {offsets = [0, 6, 768], sizes = [11, 16, 128], strides = [1, 1, 1]} : vector<11x24x896xf32> to vector<11x16x128xf32>
    %16 = arith.addf %14, %15 : vector<11x16x128xf32>
    %c0_3 = arith.constant 0 : index
    %c0_4 = arith.constant 0 : index
    %17 = vector.load %arg3[%c0_3, %c0_4] : memref<1x128xf32, #tpu.memory_space<vmem>>, vector<1x128xf32>
    %18 = vector.shape_cast %17 : vector<1x128xf32> to vector<1x1x128xf32>
    %19 = vector.broadcast %18 : vector<1x1x128xf32> to vector<11x16x128xf32>
    %20 = arith.addf %16, %19 : vector<11x16x128xf32>
    %21 = vector.extract_strided_slice %20 {offsets = [0, 0, 0], sizes = [11, 10, 128], strides = [1, 1, 1]} : vector<11x16x128xf32> to vector<11x10x128xf32>
    %22 = vector.extract_strided_slice %21 {offsets = [0, 0, 0], sizes = [11, 10, 100], strides = [1, 1, 1]} : vector<11x10x128xf32> to vector<11x10x100xf32>
    %23 = vector.extract_strided_slice %21 {offsets = [0, 0, 10], sizes = [11, 10, 100], strides = [1, 1, 1]} : vector<11x10x128xf32> to vector<11x10x100xf32>
    %24 = arith.maximumf %22, %23 : vector<11x10x100xf32>
    %25 = vector.extract_strided_slice %21 {offsets = [0, 0, 20], sizes = [11, 10, 100], strides = [1, 1, 1]} : vector<11x10x128xf32> to vector<11x10x100xf32>
    %26 = arith.maximumf %24, %25 : vector<11x10x100xf32>
    %27 = vector.extract_strided_slice %20 {offsets = [0, 1, 0], sizes = [11, 10, 128], strides = [1, 1, 1]} : vector<11x16x128xf32> to vector<11x10x128xf32>
    %28 = vector.extract_strided_slice %27 {offsets = [0, 0, 0], sizes = [11, 10, 100], strides = [1, 1, 1]} : vector<11x10x128xf32> to vector<11x10x100xf32>
    %29 = arith.maximumf %26, %28 : vector<11x10x100xf32>
    %30 = vector.extract_strided_slice %27 {offsets = [0, 0, 10], sizes = [11, 10, 100], strides = [1, 1, 1]} : vector<11x10x128xf32> to vector<11x10x100xf32>
    %31 = arith.maximumf %29, %30 : vector<11x10x100xf32>
    %32 = vector.extract_strided_slice %27 {offsets = [0, 0, 20], sizes = [11, 10, 100], strides = [1, 1, 1]} : vector<11x10x128xf32> to vector<11x10x100xf32>
    %33 = arith.maximumf %31, %32 : vector<11x10x100xf32>
    %34 = vector.extract_strided_slice %20 {offsets = [0, 2, 0], sizes = [11, 10, 128], strides = [1, 1, 1]} : vector<11x16x128xf32> to vector<11x10x128xf32>
    %35 = vector.extract_strided_slice %34 {offsets = [0, 0, 0], sizes = [11, 10, 100], strides = [1, 1, 1]} : vector<11x10x128xf32> to vector<11x10x100xf32>
    %36 = arith.maximumf %33, %35 : vector<11x10x100xf32>
    %37 = vector.extract_strided_slice %34 {offsets = [0, 0, 10], sizes = [11, 10, 100], strides = [1, 1, 1]} : vector<11x10x128xf32> to vector<11x10x100xf32>
    %38 = arith.maximumf %36, %37 : vector<11x10x100xf32>
    %39 = vector.extract_strided_slice %34 {offsets = [0, 0, 20], sizes = [11, 10, 100], strides = [1, 1, 1]} : vector<11x10x128xf32> to vector<11x10x100xf32>
    %40 = arith.maximumf %38, %39 : vector<11x10x100xf32>
    %cst_5 = arith.constant 0.000000e+00 : f32
    %41 = vector.broadcast %cst_5 : f32 to vector<11x10x100xf32>
    %42 = arith.cmpf ogt, %40, %41 : vector<11x10x100xf32>
    %cst_6 = arith.constant -2.838800e+00 : f32
    %43 = vector.broadcast %cst_6 : f32 to vector<11x10x100xf32>
    %44 = arith.mulf %40, %43 : vector<11x10x100xf32>
    %45 = arith.select %42, %40, %44 : vector<11x10x100xi1>, vector<11x10x100xf32>
    %c0_7 = arith.constant 0 : index
    %c0_8 = arith.constant 0 : index
    %c0_9 = arith.constant 0 : index
    %46 = vector.load %arg4[%c0_7, %c0_8, %c0_9] : memref<11x10x100xf32, #tpu.memory_space<vmem>>, vector<11x10x100xf32>
    tpu.vector_store %arg4[%c0_7, %c0_8, %c0_9], %45 {strides = array<i32>} : memref<11x10x100xf32, #tpu.memory_space<vmem>>, vector<11x10x100xf32>,
    return
  }
  func.func @transform_0(%arg0: i32) -> (i32, i32) {
    %c0_i32 = arith.constant 0 : i32
    %c0_i32_0 = arith.constant 0 : i32
    return %arg0, %c0_i32 : i32, i32
  }
  func.func @transform_1(%arg0: i32) -> (i32, i32) {
    %c0_i32 = arith.constant 0 : i32
    %c0_i32_0 = arith.constant 0 : i32
    %c0_i32_1 = arith.constant 0 : i32
    return %c0_i32, %c0_i32_0 : i32, i32
  }
  func.func @transform_2(%arg0: i32) -> (i32, i32) {
    %c0_i32 = arith.constant 0 : i32
    %c0_i32_0 = arith.constant 0 : i32
    %c0_i32_1 = arith.constant 0 : i32
    return %c0_i32, %c0_i32_0 : i32, i32
  }
  func.func @transform_3(%arg0: i32) -> (i32, i32, i32) {
    %c0_i32 = arith.constant 0 : i32
    %c0_i32_0 = arith.constant 0 : i32
    %c0_i32_1 = arith.constant 0 : i32
    return %arg0, %c0_i32, %c0_i32_0 : i32, i32, i32
  }
}

</mosaic_0001>

<llo_original>
// kernel: tile.8
$region0: #{tile.8}
  #allocation0 [shape = 's32[1]{0}', space=sflag, size = 0x4, scoped, tag = 'scoped memory for tile.8']
  %s0 = inlined_call_operand.vmem [shape: f32[10], index: 0, kind: input, shape index: {}]
  %s1 = inlined_call_operand.vmem [shape: f32[12,10], index: 1, kind: output, shape index: {}]
  // Predicated region
  $region2: #{tile.8} parent=0 // pred_check
    _
  $region3: #{tile.8} parent=0 // pred_check_branch
    %3 = sbr.rel (0) target = $region5
  $region4: #{tile.8} parent=0 // pred_region
    _
  $region5: #{tile.8} parent=0 // pred_fallthru
    _
  %v4 = vld [vmem:[%s0] ss:$0 sm:$0xff]
  %5 = vst [vmem:[%s1] sm:$0xff] %v4
  %s6 = scalar_lea.vmem %s1, 8
  %7 = vst [vmem:[%s6] sm:$0xff] %v4

// kernel: tile.9
$region0: #{tile.9}
  %s0 = inlined_call_operand.vmem [shape: f32[12,10], index: 0, kind: input, shape index: {}]
  %s1 = inlined_call_operand.vmem [shape: f32[120], index: 1, kind: output, shape index: {}]
  $region1: #{tile.9} parent=0
    #allocation0 [shape = 'u8[4096]{0}', space=vmem, size = 0x1000, scoped, tag = 'scoped mem for output reshape']
    %v2 = vld [vmem:[%s0] sm:$0x1]
    %vm3 = vcmask 80896
    %4 = vst.msk [vmem:[#allocation0] sm:$0x1] %vm3, %v2
    %s5 = scalar_lea.vmem %s0, 11
    %v6 = vld [vmem:[%s5] sm:$0x1]
    %7 = vrot.lane.b32.xlu0 %v6, 110
    %v8 = vpop.permute.xlu0 %7
    %vm9 = vcmask 982896
    %10 = vst.msk [vmem:[#allocation0] sm:$0x1] %vm9, %v8
    %s11 = scalar_lea.vmem %s0, 10
    %v12 = vld [vmem:[%s11] sm:$0x1]
    %13 = vrot.lane.b32.xlu0 %v12, 100
    %v14 = vpop.permute.xlu0 %13
    %vm15 = vcmask 900896
    %16 = vst.msk [vmem:[#allocation0] sm:$0x1] %vm15, %v14
    %s17 = scalar_lea.vmem %s0, 9
    %v18 = vld [vmem:[%s17] sm:$0x1]
    %19 = vrot.lane.b32.xlu0 %v18, 90
    %v20 = vpop.permute.xlu0 %19
    %vm21 = vcmask 818896
    %22 = vst.msk [vmem:[#allocation0] sm:$0x1] %vm21, %v20
    %s23 = scalar_lea.vmem %s0, 8
    %v24 = vld [vmem:[%s23] sm:$0x1]
    %25 = vrot.lane.b32.xlu0 %v24, 80
    %v26 = vpop.permute.xlu0 %25
    %vm27 = vcmask 736896
    %28 = vst.msk [vmem:[#allocation0] sm:$0x1] %vm27, %v26
    %s29 = scalar_lea.vmem %s0, 7
    %v30 = vld [vmem:[%s29] sm:$0x1]
    %31 = vrot.lane.b32.xlu0 %v30, 70
    %v32 = vpop.permute.xlu0 %31
    %vm33 = vcmask 654896
    %34 = vst.msk [vmem:[#allocation0] sm:$0x1] %vm33, %v32
    %s35 = scalar_lea.vmem %s0, 6
    %v36 = vld [vmem:[%s35] sm:$0x1]
    %37 = vrot.lane.b32.xlu0 %v36, 60
    %v38 = vpop.permute.xlu0 %37
    %vm39 = vcmask 572896
    %40 = vst.msk [vmem:[#allocation0] sm:$0x1] %vm39, %v38
    %s41 = scalar_lea.vmem %s0, 5
    %v42 = vld [vmem:[%s41] sm:$0x1]
    %43 = vrot.lane.b32.xlu0 %v42, 50
    %v44 = vpop.permute.xlu0 %43
    %vm45 = vcmask 490896
    %46 = vst.msk [vmem:[#allocation0] sm:$0x1] %vm45, %v44
    %s47 = scalar_lea.vmem %s0, 4
    %v48 = vld [vmem:[%s47] sm:$0x1]
    %49 = vrot.lane.b32.xlu0 %v48, 40
    %v50 = vpop.permute.xlu0 %49
    %vm51 = vcmask 408896
    %52 = vst.msk [vmem:[#allocation0] sm:$0x1] %vm51, %v50
    %s53 = scalar_lea.vmem %s0, 3
    %v54 = vld [vmem:[%s53] sm:$0x1]
    %55 = vrot.lane.b32.xlu0 %v54, 30
    %v56 = vpop.permute.xlu0 %55
    %vm57 = vcmask 326896
    %58 = vst.msk [vmem:[#allocation0] sm:$0x1] %vm57, %v56
    %s59 = scalar_lea.vmem %s0, 2
    %v60 = vld [vmem:[%s59] sm:$0x1]
    %61 = vrot.lane.b32.xlu0 %v60, 20
    %v62 = vpop.permute.xlu0 %61
    %vm63 = vcmask 244896
    %64 = vst.msk [vmem:[#allocation0] sm:$0x1] %vm63, %v62
    %s65 = scalar_lea.vmem %s0, 1
    %v66 = vld [vmem:[%s65] sm:$0x1]
    %67 = vrot.lane.b32.xlu0 %v66, 10
    %v68 = vpop.permute.xlu0 %67
    %vm69 = vcmask 162896
    %70 = vst.msk [vmem:[#allocation0] sm:$0x1] %vm69, %v68
    %s72 = sshll.u32 1, 1
    %s73 = ssub.s32 %s72, 1
    %v75 = vld [vmem:[#allocation0] sm:%s73]
    %s76 = sshll.u32 1, 1
    %s77 = ssub.s32 %s76, 1
    %78 = vst [vmem:[%s1] sm:%s77] %v75

// kernel: model_forward.1
$region0: #{model_forward.1}
  #allocation0 [shape = 'u32[]', space=smem, size = 0x4, offset = 0x4, fixed_abs, tag = 'smem constant byte address 0x4 - core index']
  #allocation1 [shape = 'u32[144,128]{1,0:T(1,128)}', space=vmem, size = 0x12000, scoped, tag = 'internal scratch']
  %s0 = inlined_call_operand.vmem [shape: f32[528,256], index: 0, kind: input, shape index: {}]
  %s1 = inlined_call_operand.vmem [shape: f32[256,896], index: 1, kind: input, shape index: {}]
  %s2 = inlined_call_operand.vmem [shape: f32[1,128], index: 2, kind: input, shape index: {}]
  %s3 = inlined_call_operand.vmem [shape: f32[22,10,100], index: 3, kind: output, shape index: {}]
  %s4 = sld [smem:[#allocation0]]
  $region45: #{model_forward.1} parent=0
    _
  %s6 = ssub.s32 1, %s4
  %s7 = scalar_select 0, %s6, %s4
  loop: start=0, step=1, limit=4
  $region2: #{model_forward.1} parent=0 // loop_pre_header
    _
  $region3: #{model_forward.1} parent=0 // loop_header
    %s9 = sphi 0, %s13
    %p10 = scmp.ge.s32.totalorder %s9, 4
    %s19 = sphi 0, %s21
    %s22 = sphi 0, %s19
    %s23 = sphi 0, %s22
    %s39 = sphi 0, %s23
    %s43 = sphi 0, %s43
    %s45 = sphi 0, %s43
    %s46 = sphi 0, %s45
    %s60 = sphi 0, %s46
    %s64 = sphi 0, %s64
    %s66 = sphi 0, %s64
    %s67 = sphi 0, %s66
    %s81 = sphi 0, %s67
    %s87 = sphi 0, %s89
    %s90 = sphi 0, %s87
    %s91 = sphi 0, %s90
    %s107 = sphi 0, %s91
  $region4: #{model_forward.1} parent=0 // loop_header_branch
    %12 = sbr.rel (%p10) target = $region8
  $region5: #{model_forward.1} parent=0 // loop_body
    %s14 = ssub.s32 %s9, 1
    %s15 = ssub.s32 %s9, 2
    %s16 = sadd.s32 %s9, 1
    %s17 = ssub.s32 %s9, %s16
    %p18 = scmp.eq.s32.totalorder %s17, 0
    %s20 = sadd.s32 %s19, 1
    %s21 = scalar_select %p18, %s19, %s20
    %p24 = pneg %p18
    %p25 = scmp.eq.s32.totalorder %s9, 1
    %p26 = por %p24, %p25
    %p27 = scmp.ne.s32.totalorder %s19, %s22
    %p28 = scmp.eq.s32.totalorder %s9, 0
    %p29 = por %p27, %p28
    %p30 = scmp.ne.s32.totalorder %s19, %s22
    %p31 = scmp.eq.s32.totalorder %s14, 1
    %p32 = por %p30, %p31
    %p33 = scmp.ne.s32.totalorder %s22, %s23
    %p34 = scmp.eq.s32.totalorder %s14, 0
    %p35 = por %p33, %p34
    %p36 = scmp.ne.s32.totalorder %s22, %s23
    %p37 = scmp.eq.s32.totalorder %s15, 1
    %p38 = por %p36, %p37
    %p40 = scmp.ne.s32.totalorder %s23, %s39
    %p41 = scmp.eq.s32.totalorder %s15, 0
    %p42 = por %p40, %p41
    %s44 = sadd.s32 %s43, 1
    %p47 = scmp.eq.s32.totalorder %s9, 1
    %p48 = scmp.ne.s32.totalorder %s43, %s45
    %p49 = scmp.eq.s32.totalorder %s9, 0
    %p50 = por %p48, %p49
    %p51 = scmp.ne.s32.totalorder %s43, %s45
    %p52 = scmp.eq.s32.totalorder %s14, 1
    %p53 = por %p51, %p52
    %p54 = scmp.ne.s32.totalorder %s45, %s46
    %p55 = scmp.eq.s32.totalorder %s14, 0
    %p56 = por %p54, %p55
    %p57 = scmp.ne.s32.totalorder %s45, %s46
    %p58 = scmp.eq.s32.totalorder %s15, 1
    %p59 = por %p57, %p58
    %p61 = scmp.ne.s32.totalorder %s46, %s60
    %p62 = scmp.eq.s32.totalorder %s15, 0
    %p63 = por %p61, %p62
    %s65 = sadd.s32 %s64, 1
    %p68 = scmp.eq.s32.totalorder %s9, 1
    %p69 = scmp.ne.s32.totalorder %s64, %s66
    %p70 = scmp.eq.s32.totalorder %s9, 0
    %p71 = por %p69, %p70
    %p72 = scmp.ne.s32.totalorder %s64, %s66
    %p73 = scmp.eq.s32.totalorder %s14, 1
    %p74 = por %p72, %p73
    %p75 = scmp.ne.s32.totalorder %s66, %s67
    %p76 = scmp.eq.s32.totalorder %s14, 0
    %p77 = por %p75, %p76
    %p78 = scmp.ne.s32.totalorder %s66, %s67
    %p79 = scmp.eq.s32.totalorder %s15, 1
    %p80 = por %p78, %p79
    %p82 = scmp.ne.s32.totalorder %s67, %s81
    %p83 = scmp.eq.s32.totalorder %s15, 0
    %p84 = por %p82, %p83
    %s85 = ssub.s32 %s9, %s16
    %p86 = scmp.eq.s32.totalorder %s85, 0
    %s88 = sadd.s32 %s87, 1
    %s89 = scalar_select %p86, %s87, %s88
    %p92 = pneg %p86
    %p93 = scmp.eq.s32.totalorder %s9, 1
    %p94 = por %p92, %p93
    %p95 = scmp.ne.s32.totalorder %s87, %s90
    %p96 = scmp.eq.s32.totalorder %s9, 0
    %p97 = por %p95, %p96
    %p98 = scmp.ne.s32.totalorder %s87, %s90
    %p99 = scmp.eq.s32.totalorder %s14, 1
    %p100 = por %p98, %p99
    %p101 = scmp.ne.s32.totalorder %s90, %s91
    %p102 = scmp.eq.s32.totalorder %s14, 0
    %p103 = por %p101, %p102
    %p104 = scmp.ne.s32.totalorder %s90, %s91
    %p105 = scmp.eq.s32.totalorder %s15, 1
    %p106 = por %p104, %p105
    %p108 = scmp.ne.s32.totalorder %s91, %s107
    %p109 = scmp.eq.s32.totalorder %s15, 0
    %p110 = por %p108, %p109
    %p111 = scmp.le.s32.totalorder 1, %s9
    %p112 = scmp.lt.s32.totalorder %s9, 3
    %p113 = pnand %p111, %p112
    %p114 = pneg %p113
    // Predicated region
    $region9: #{model_forward.1} parent=5 // pred_check
      _
    $region10: #{model_forward.1} parent=5 // pred_check_branch
      %116 = sbr.rel (%p113) target = $region12
    $region11: #{model_forward.1} parent=5 // pred_region
      %s117 = ssub.s32 %s9, 1
      // Predicated region
      $region13: #{model_forward.1} parent=11 // pred_check
        %p118 = pneg %p56
      $region14: #{model_forward.1} parent=11 // pred_check_branch
        %120 = sbr.rel (%p118) target = $region16
      $region15: #{model_forward.1} parent=11 // pred_region
        _
      $region16: #{model_forward.1} parent=11 // pred_fallthru
        _
      // Predicated region
      $region17: #{model_forward.1} parent=11 // pred_check
        %p121 = pneg %p77
      $region18: #{model_forward.1} parent=11 // pred_check_branch
        %123 = sbr.rel (%p121) target = $region20
      $region19: #{model_forward.1} parent=11 // pred_region
        _
      $region20: #{model_forward.1} parent=11 // pred_fallthru
        _
    $region12: #{model_forward.1} parent=5 // pred_fallthru
      _
    %p124 = scmp.lt.s32.totalorder %s9, 2
    // Predicated region
    $region21: #{model_forward.1} parent=5 // pred_check
      %p125 = pneg %p124
    $region22: #{model_forward.1} parent=5 // pred_check_branch
      %127 = sbr.rel (%p125) target = $region24
    $region23: #{model_forward.1} parent=5 // pred_region
      // Predicated region
      $region25: #{model_forward.1} parent=23 // pred_check
        %p128 = pneg %p29
      $region26: #{model_forward.1} parent=23 // pred_check_branch
        %130 = sbr.rel (%p128) target = $region28
      $region27: #{model_forward.1} parent=23 // pred_region
        %s131 = smul.u32 33, %s9
        %p132 = scmp.lt.s32.totalorder %s131, 65
        %s133 = scalar_select %p132, %s131, 65
        %s134 = smul.addr %s133, 2
        %s135 = smul.addr %s134, 8
        %s136 = scalar_lea.vmem %s0, %s135
        %s137 = smul.u32 33, %s9
      $region28: #{model_forward.1} parent=23 // pred_fallthru
        _
    $region24: #{model_forward.1} parent=5 // pred_fallthru
      _
    %p138 = scmp.le.s32.totalorder 1, %s9
    %p139 = scmp.lt.s32.totalorder %s9, 3
    %p140 = pnand %p138, %p139
    %p141 = pneg %p140
    // Predicated region
    $region29: #{model_forward.1} parent=5 // pred_check
      _
    $region30: #{model_forward.1} parent=5 // pred_check_branch
      %143 = sbr.rel (%p140) target = $region32
    $region31: #{model_forward.1} parent=5 // pred_region
      %s144 = ssub.s32 %s9, 1
      %s145 = smul.u32 33, %s14
      %p146 = scmp.lt.s32.totalorder %s145, 65
      %s147 = scalar_select %p146, %s145, 65
      %s148 = smul.addr %s147, 2
      %s149 = smul.addr %s148, 8
      %s150 = scalar_lea.vmem %s0, %s149
      %p151 = pneg %p35
      %p152 = pneg %p32
      %p153 = pneg %p56
      %p154 = pneg %p53
      %p155 = pneg %p77
      %p156 = pneg %p74
      %p157 = pneg %p103
      %p158 = pneg %p100
      %s159 = smul.u32 11, %s14
      %p160 = scmp.lt.s32.totalorder %s159, 21
      %s161 = scalar_select %p160, %s159, 21
      %s162 = smul.addr %s161, 2
      %s163 = smul.addr %s162, 8
      %s164 = scalar_lea.vmem %s3, %s163
      %s165 = smul.u32 33, %s14
      %p166 = scmp.lt.s32.totalorder %s165, 65
      %s167 = scalar_select %p166, %s165, 65
      %s168 = smul.addr %s167, 2
      %s169 = smul.addr %s168, 8
      %s170 = scalar_lea.vmem %s0, %s169
      %s171 = smul.u32 33, %s14
      %s172 = smul.u32 11, %s14
      %p173 = scmp.lt.s32.totalorder %s172, 21
      %s174 = scalar_select %p173, %s172, 21
      %s175 = smul.addr %s174, 2
      %s176 = smul.addr %s175, 8
      %s177 = scalar_lea.vmem %s3, %s176
      %s178 = smul.u32 11, %s14
      %v179 = vld [vmem:[%s170] sm:$0xff]
      %v180 = vld [vmem:[%s170 + $0x8] sm:$0xff]
      %v181 = vld [vmem:[%s170 + $0x10] sm:$0xff]
      %v182 = vld [vmem:[%s170 + $0x18] sm:$0xff]
      %v183 = vld [vmem:[%s170 + $0x20] sm:$0xff]
      %v184 = vld [vmem:[%s170 + $0x28] sm:$0xff]
      %v185 = vld [vmem:[%s170 + $0x30] sm:$0xff]
      %v186 = vld [vmem:[%s170 + $0x38] sm:$0xff]
      %v187 = vld [vmem:[%s170 + $0x40] sm:$0xff]
      %v188 = vld [vmem:[%s170 + $0x48] sm:$0xff]
      %v189 = vld [vmem:[%s170 + $0x50] sm:$0xff]
      %v190 = vld [vmem:[%s170 + $0x58] sm:$0xff]
      %v191 = vld [vmem:[%s170 + $0x60] sm:$0xff]
      %v192 = vld [vmem:[%s170 + $0x68] sm:$0xff]
      %v193 = vld [vmem:[%s170 + $0x70] sm:$0xff]
      %v194 = vld [vmem:[%s170 + $0x78] sm:$0xff]
      %v195 = vld [vmem:[%s170 + $0x80] sm:$0xff]
      %v196 = vld [vmem:[%s170 + $0x88] sm:$0xff]
      %v197 = vld [vmem:[%s170 + $0x90] sm:$0xff]
      %v198 = vld [vmem:[%s170 + $0x98] sm:$0xff]
      %v199 = vld [vmem:[%s170 + $0xa0] sm:$0xff]
      %v200 = vld [vmem:[%s170 + $0xa8] sm:$0xff]
      %v201 = vld [vmem:[%s170 + $0xb0] sm:$0xff]
      %v202 = vld [vmem:[%s170 + $0xb8] sm:$0xff]
      %v203 = vld [vmem:[%s170 + $0xc0] sm:$0xff]
      %v204 = vld [vmem:[%s170 + $0xc8] sm:$0xff]
      %v205 = vld [vmem:[%s170 + $0xd0] sm:$0xff]
      %v206 = vld [vmem:[%s170 + $0xd8] sm:$0xff]
      %v207 = vld [vmem:[%s170 + $0xe0] sm:$0xff]
      %v208 = vld [vmem:[%s170 + $0xe8] sm:$0xff]
      %v209 = vld [vmem:[%s170 + $0xf0] sm:$0xff]
      %v210 = vld [vmem:[%s170 + $0xf8] sm:$0xff]
      %v211 = vld [vmem:[%s170 + $0x100] sm:$0xff]
      %v212 = vld [vmem:[%s170 + $0x108] sm:$0xff]
      %v213 = vld [vmem:[%s170 + $0x110] sm:$0xff]
      %v214 = vld [vmem:[%s170 + $0x118] sm:$0xff]
      %v215 = vld [vmem:[%s170 + $0x120] sm:$0xff]
      %v216 = vld [vmem:[%s170 + $0x128] sm:$0xff]
      %v217 = vld [vmem:[%s170 + $0x130] sm:$0xff]
      %v218 = vld [vmem:[%s170 + $0x138] sm:$0xff]
      %v219 = vld [vmem:[%s170 + $0x140] sm:$0xff]
      %v220 = vld [vmem:[%s170 + $0x148] sm:$0xff]
      %v221 = vld [vmem:[%s170 + $0x150] sm:$0xff]
      %v222 = vld [vmem:[%s170 + $0x158] sm:$0xff]
      %v223 = vld [vmem:[%s170 + $0x160] sm:$0xff]
      %v224 = vld [vmem:[%s170 + $0x168] sm:$0xff]
      %v225 = vld [vmem:[%s170 + $0x170] sm:$0xff]
      %v226 = vld [vmem:[%s170 + $0x178] sm:$0xff]
      %v227 = vld [vmem:[%s170 + $0x180] sm:$0xff]
      %v228 = vld [vmem:[%s170 + $0x188] sm:$0xff]
      %v229 = vld [vmem:[%s170 + $0x190] sm:$0xff]
      %v230 = vld [vmem:[%s170 + $0x198] sm:$0xff]
      %v231 = vld [vmem:[%s170 + $0x1a0] sm:$0xff]
      %v232 = vld [vmem:[%s170 + $0x1a8] sm:$0xff]
      %v233 = vld [vmem:[%s170 + $0x1b0] sm:$0xff]
      %v234 = vld [vmem:[%s170 + $0x1b8] sm:$0xff]
      %v235 = vld [vmem:[%s170 + $0x1c0] sm:$0xff]
      %v236 = vld [vmem:[%s170 + $0x1c8] sm:$0xff]
      %v237 = vld [vmem:[%s170 + $0x1d0] sm:$0xff]
      %v238 = vld [vmem:[%s170 + $0x1d8] sm:$0xff]
      %v239 = vld [vmem:[%s170 + $0x1e0] sm:$0xff]
      %v240 = vld [vmem:[%s170 + $0x1e8] sm:$0xff]
      %v241 = vld [vmem:[%s170 + $0x1f0] sm:$0xff]
      %v242 = vld [vmem:[%s170 + $0x1f8] sm:$0xff]
      %v243 = vld [vmem:[%s170 + $0x200] sm:$0xff]
      %v244 = vld [vmem:[%s170 + $0x208] sm:$0xff]
      %v245 = vld [vmem:[%s1] sm:$0xff]
      %v246 = vld [vmem:[%s1 + $0x8] sm:$0xff]
      %v247 = vld [vmem:[%s1 + $0x10] sm:$0xff]
      %v248 = vld [vmem:[%s1 + $0x18] sm:$0xff]
      %v249 = vld [vmem:[%s1 + $0x20] sm:$0xff]
      %v250 = vld [vmem:[%s1 + $0x28] sm:$0xff]
      %v251 = vld [vmem:[%s1 + $0x30] sm:$0xff]
      %v252 = vld [vmem:[%s1 + $0x38] sm:$0xff]
      %v253 = vld [vmem:[%s1 + $0x40] sm:$0xff]
      %v254 = vld [vmem:[%s1 + $0x48] sm:$0xff]
      %v255 = vld [vmem:[%s1 + $0x50] sm:$0xff]
      %v256 = vld [vmem:[%s1 + $0x58] sm:$0xff]
      %v257 = vld [vmem:[%s1 + $0x60] sm:$0xff]
      %v258 = vld [vmem:[%s1 + $0x68] sm:$0xff]
      %v259 = vld [vmem:[%s1 + $0x70] sm:$0xff]
      %v260 = vld [vmem:[%s1 + $0x78] sm:$0xff]
      %v261 = vld [vmem:[%s1 + $0x80] sm:$0xff]
      %v262 = vld [vmem:[%s1 + $0x88] sm:$0xff]
      %v263 = vld [vmem:[%s1 + $0x90] sm:$0xff]
      %v264 = vld [vmem:[%s1 + $0x98] sm:$0xff]
      %v265 = vld [vmem:[%s1 + $0xa0] sm:$0xff]
      %v266 = vld [vmem:[%s1 + $0xa8] sm:$0xff]
      %v267 = vld [vmem:[%s1 + $0xb0] sm:$0xff]
      %v268 = vld [vmem:[%s1 + $0xb8] sm:$0xff]
      %v269 = vld [vmem:[%s1 + $0xc0] sm:$0xff]
      %v270 = vld [vmem:[%s1 + $0xc8] sm:$0xff]
      %v271 = vld [vmem:[%s1 + $0xd0] sm:$0xff]
      %v272 = vld [vmem:[%s1 + $0xd8] sm:$0xff]
      %v273 = vld [vmem:[%s1 + $0xe0] sm:$0xff]
      %v274 = vld [vmem:[%s1 + $0xe8] sm:$0xff]
      %v275 = vld [vmem:[%s1 + $0xf0] sm:$0xff]
      %v276 = vld [vmem:[%s1 + $0xf8] sm:$0xff]
      %v277 = vld [vmem:[%s1 + $0x100] sm:$0xff]
      %v278 = vld [vmem:[%s1 + $0x108] sm:$0xff]
      %v279 = vld [vmem:[%s1 + $0x110] sm:$0xff]
      %v280 = vld [vmem:[%s1 + $0x118] sm:$0xff]
      %v281 = vld [vmem:[%s1 + $0x120] sm:$0xff]
      %v282 = vld [vmem:[%s1 + $0x128] sm:$0xff]
      %v283 = vld [vmem:[%s1 + $0x130] sm:$0xff]
      %v284 = vld [vmem:[%s1 + $0x138] sm:$0xff]
      %v285 = vld [vmem:[%s1 + $0x140] sm:$0xff]
      %v286 = vld [vmem:[%s1 + $0x148] sm:$0xff]
      %v287 = vld [vmem:[%s1 + $0x150] sm:$0xff]
      %v288 = vld [vmem:[%s1 + $0x158] sm:$0xff]
      %v289 = vld [vmem:[%s1 + $0x160] sm:$0xff]
      %v290 = vld [vmem:[%s1 + $0x168] sm:$0xff]
      %v291 = vld [vmem:[%s1 + $0x170] sm:$0xff]
      %v292 = vld [vmem:[%s1 + $0x178] sm:$0xff]
      %v293 = vld [vmem:[%s1 + $0x180] sm:$0xff]
      %v294 = vld [vmem:[%s1 + $0x188] sm:$0xff]
      %v295 = vld [vmem:[%s1 + $0x190] sm:$0xff]
      %v296 = vld [vmem:[%s1 + $0x198] sm:$0xff]
      %v297 = vld [vmem:[%s1 + $0x1a0] sm:$0xff]
      %v298 = vld [vmem:[%s1 + $0x1a8] sm:$0xff]
      %v299 = vld [vmem:[%s1 + $0x1b0] sm:$0xff]
      %v300 = vld [vmem:[%s1 + $0x1b8] sm:$0xff]
      %v301 = vld [vmem:[%s1 + $0x1c0] sm:$0xff]
      %v302 = vld [vmem:[%s1 + $0x1c8] sm:$0xff]
      %v303 = vld [vmem:[%s1 + $0x1d0] sm:$0xff]
      %v304 = vld [vmem:[%s1 + $0x1d8] sm:$0xff]
      %v305 = vld [vmem:[%s1 + $0x1e0] sm:$0xff]
      %v306 = vld [vmem:[%s1 + $0x1e8] sm:$0xff]
      %v307 = vld [vmem:[%s1 + $0x1f0] sm:$0xff]
      %v308 = vld [vmem:[%s1 + $0x1f8] sm:$0xff]
      %v309 = vld [vmem:[%s1 + $0x200] sm:$0xff]
      %v310 = vld [vmem:[%s1 + $0x208] sm:$0xff]
      %v311 = vld [vmem:[%s1 + $0x210] sm:$0xff]
      %v312 = vld [vmem:[%s1 + $0x218] sm:$0xff]
      %v313 = vld [vmem:[%s1 + $0x220] sm:$0xff]
      %v314 = vld [vmem:[%s1 + $0x228] sm:$0xff]
      %v315 = vld [vmem:[%s1 + $0x230] sm:$0xff]
      %v316 = vld [vmem:[%s1 + $0x238] sm:$0xff]
      %v317 = vld [vmem:[%s1 + $0x240] sm:$0xff]
      %v318 = vld [vmem:[%s1 + $0x248] sm:$0xff]
      %v319 = vld [vmem:[%s1 + $0x250] sm:$0xff]
      %v320 = vld [vmem:[%s1 + $0x258] sm:$0xff]
      %v321 = vld [vmem:[%s1 + $0x260] sm:$0xff]
      %v322 = vld [vmem:[%s1 + $0x268] sm:$0xff]
      %v323 = vld [vmem:[%s1 + $0x270] sm:$0xff]
      %v324 = vld [vmem:[%s1 + $0x278] sm:$0xff]
      %v325 = vld [vmem:[%s1 + $0x280] sm:$0xff]
      %v326 = vld [vmem:[%s1 + $0x288] sm:$0xff]
      %v327 = vld [vmem:[%s1 + $0x290] sm:$0xff]
      %v328 = vld [vmem:[%s1 + $0x298] sm:$0xff]
      %v329 = vld [vmem:[%s1 + $0x2a0] sm:$0xff]
      %v330 = vld [vmem:[%s1 + $0x2a8] sm:$0xff]
      %v331 = vld [vmem:[%s1 + $0x2b0] sm:$0xff]
      %v332 = vld [vmem:[%s1 + $0x2b8] sm:$0xff]
      %v333 = vld [vmem:[%s1 + $0x2c0] sm:$0xff]
      %v334 = vld [vmem:[%s1 + $0x2c8] sm:$0xff]
      %v335 = vld [vmem:[%s1 + $0x2d0] sm:$0xff]
      %v336 = vld [vmem:[%s1 + $0x2d8] sm:$0xff]
      %v337 = vld [vmem:[%s1 + $0x2e0] sm:$0xff]
      %v338 = vld [vmem:[%s1 + $0x2e8] sm:$0xff]
      %v339 = vld [vmem:[%s1 + $0x2f0] sm:$0xff]
      %v340 = vld [vmem:[%s1 + $0x2f8] sm:$0xff]
      %v341 = vld [vmem:[%s1 + $0x300] sm:$0xff]
      %v342 = vld [vmem:[%s1 + $0x308] sm:$0xff]
      %v343 = vld [vmem:[%s1 + $0x310] sm:$0xff]
      %v344 = vld [vmem:[%s1 + $0x318] sm:$0xff]
      %v345 = vld [vmem:[%s1 + $0x320] sm:$0xff]
      %v346 = vld [vmem:[%s1 + $0x328] sm:$0xff]
      %v347 = vld [vmem:[%s1 + $0x330] sm:$0xff]
      %v348 = vld [vmem:[%s1 + $0x338] sm:$0xff]
      %v349 = vld [vmem:[%s1 + $0x340] sm:$0xff]
      %v350 = vld [vmem:[%s1 + $0x348] sm:$0xff]
      %v351 = vld [vmem:[%s1 + $0x350] sm:$0xff]
      %v352 = vld [vmem:[%s1 + $0x358] sm:$0xff]
      %v353 = vld [vmem:[%s1 + $0x360] sm:$0xff]
      %v354 = vld [vmem:[%s1 + $0x368] sm:$0xff]
      %v355 = vld [vmem:[%s1 + $0x370] sm:$0xff]
      %v356 = vld [vmem:[%s1 + $0x378] sm:$0xff]
      %v357 = vld [vmem:[%s1 + $0x380] sm:$0xff]
      %v358 = vld [vmem:[%s1 + $0x388] sm:$0xff]
      %v359 = vld [vmem:[%s1 + $0x390] sm:$0xff]
      %v360 = vld [vmem:[%s1 + $0x398] sm:$0xff]
      %v361 = vld [vmem:[%s1 + $0x3a0] sm:$0xff]
      %v362 = vld [vmem:[%s1 + $0x3a8] sm:$0xff]
      %v363 = vld [vmem:[%s1 + $0x3b0] sm:$0xff]
      %v364 = vld [vmem:[%s1 + $0x3b8] sm:$0xff]
      %v365 = vld [vmem:[%s1 + $0x3c0] sm:$0xff]
      %v366 = vld [vmem:[%s1 + $0x3c8] sm:$0xff]
      %v367 = vld [vmem:[%s1 + $0x3d0] sm:$0xff]
      %v368 = vld [vmem:[%s1 + $0x3d8] sm:$0xff]
      %v369 = vld [vmem:[%s1 + $0x3e0] sm:$0xff]
      %v370 = vld [vmem:[%s1 + $0x3e8] sm:$0xff]
      %v371 = vld [vmem:[%s1 + $0x3f0] sm:$0xff]
      %v372 = vld [vmem:[%s1 + $0x3f8] sm:$0xff]
      %v373 = vld [vmem:[%s1 + $0x400] sm:$0xff]
      %v374 = vld [vmem:[%s1 + $0x408] sm:$0xff]
      %v375 = vld [vmem:[%s1 + $0x410] sm:$0xff]
      %v376 = vld [vmem:[%s1 + $0x418] sm:$0xff]
      %v377 = vld [vmem:[%s1 + $0x420] sm:$0xff]
      %v378 = vld [vmem:[%s1 + $0x428] sm:$0xff]
      %v379 = vld [vmem:[%s1 + $0x430] sm:$0xff]
      %v380 = vld [vmem:[%s1 + $0x438] sm:$0xff]
      %v381 = vld [vmem:[%s1 + $0x440] sm:$0xff]
      %v382 = vld [vmem:[%s1 + $0x448] sm:$0xff]
      %v383 = vld [vmem:[%s1 + $0x450] sm:$0xff]
      %v384 = vld [vmem:[%s1 + $0x458] sm:$0xff]
      %v385 = vld [vmem:[%s1 + $0x460] sm:$0xff]
      %v386 = vld [vmem:[%s1 + $0x468] sm:$0xff]
      %v387 = vld [vmem:[%s1 + $0x470] sm:$0xff]
      %v388 = vld [vmem:[%s1 + $0x478] sm:$0xff]
      %v389 = vld [vmem:[%s1 + $0x480] sm:$0xff]
      %v390 = vld [vmem:[%s1 + $0x488] sm:$0xff]
      %v391 = vld [vmem:[%s1 + $0x490] sm:$0xff]
      %v392 = vld [vmem:[%s1 + $0x498] sm:$0xff]
      %v393 = vld [vmem:[%s1 + $0x4a0] sm:$0xff]
      %v394 = vld [vmem:[%s1 + $0x4a8] sm:$0xff]
      %v395 = vld [vmem:[%s1 + $0x4b0] sm:$0xff]
      %v396 = vld [vmem:[%s1 + $0x4b8] sm:$0xff]
      %v397 = vld [vmem:[%s1 + $0x4c0] sm:$0xff]
      %v398 = vld [vmem:[%s1 + $0x4c8] sm:$0xff]
      %v399 = vld [vmem:[%s1 + $0x4d0] sm:$0xff]
      %v400 = vld [vmem:[%s1 + $0x4d8] sm:$0xff]
      %v401 = vld [vmem:[%s1 + $0x4e0] sm:$0xff]
      %v402 = vld [vmem:[%s1 + $0x4e8] sm:$0xff]
      %v403 = vld [vmem:[%s1 + $0x4f0] sm:$0xff]
      %v404 = vld [vmem:[%s1 + $0x4f8] sm:$0xff]
      %v405 = vld [vmem:[%s1 + $0x500] sm:$0xff]
      %v406 = vld [vmem:[%s1 + $0x508] sm:$0xff]
      %v407 = vld [vmem:[%s1 + $0x510] sm:$0xff]
      %v408 = vld [vmem:[%s1 + $0x518] sm:$0xff]
      %v409 = vld [vmem:[%s1 + $0x520] sm:$0xff]
      %v410 = vld [vmem:[%s1 + $0x528] sm:$0xff]
      %v411 = vld [vmem:[%s1 + $0x530] sm:$0xff]
      %v412 = vld [vmem:[%s1 + $0x538] sm:$0xff]
      %v413 = vld [vmem:[%s1 + $0x540] sm:$0xff]
      %v414 = vld [vmem:[%s1 + $0x548] sm:$0xff]
      %v415 = vld [vmem:[%s1 + $0x550] sm:$0xff]
      %v416 = vld [vmem:[%s1 + $0x558] sm:$0xff]
      %v417 = vld [vmem:[%s1 + $0x560] sm:$0xff]
      %v418 = vld [vmem:[%s1 + $0x568] sm:$0xff]
      %v419 = vld [vmem:[%s1 + $0x570] sm:$0xff]
      %v420 = vld [vmem:[%s1 + $0x578] sm:$0xff]
      %v421 = vld [vmem:[%s1 + $0x580] sm:$0xff]
      %v422 = vld [vmem:[%s1 + $0x588] sm:$0xff]
      %v423 = vld [vmem:[%s1 + $0x590] sm:$0xff]
      %v424 = vld [vmem:[%s1 + $0x598] sm:$0xff]
      %v425 = vld [vmem:[%s1 + $0x5a0] sm:$0xff]
      %v426 = vld [vmem:[%s1 + $0x5a8] sm:$0xff]
      %v427 = vld [vmem:[%s1 + $0x5b0] sm:$0xff]
      %v428 = vld [vmem:[%s1 + $0x5b8] sm:$0xff]
      %v429 = vld [vmem:[%s1 + $0x5c0] sm:$0xff]
      %v430 = vld [vmem:[%s1 + $0x5c8] sm:$0xff]
      %v431 = vld [vmem:[%s1 + $0x5d0] sm:$0xff]
      %v432 = vld [vmem:[%s1 + $0x5d8] sm:$0xff]
      %v433 = vld [vmem:[%s1 + $0x5e0] sm:$0xff]
      %v434 = vld [vmem:[%s1 + $0x5e8] sm:$0xff]
      %v435 = vld [vmem:[%s1 + $0x5f0] sm:$0xff]
      %v436 = vld [vmem:[%s1 + $0x5f8] sm:$0xff]
      %v437 = vld [vmem:[%s1 + $0x600] sm:$0xff]
      %v438 = vld [vmem:[%s1 + $0x608] sm:$0xff]
      %v439 = vld [vmem:[%s1 + $0x610] sm:$0xff]
      %v440 = vld [vmem:[%s1 + $0x618] sm:$0xff]
      %v441 = vld [vmem:[%s1 + $0x620] sm:$0xff]
      %v442 = vld [vmem:[%s1 + $0x628] sm:$0xff]
      %v443 = vld [vmem:[%s1 + $0x630] sm:$0xff]
      %v444 = vld [vmem:[%s1 + $0x638] sm:$0xff]
      %v445 = vld [vmem:[%s1 + $0x640] sm:$0xff]
      %v446 = vld [vmem:[%s1 + $0x648] sm:$0xff]
      %v447 = vld [vmem:[%s1 + $0x650] sm:$0xff]
      %v448 = vld [vmem:[%s1 + $0x658] sm:$0xff]
      %v449 = vld [vmem:[%s1 + $0x660] sm:$0xff]
      %v450 = vld [vmem:[%s1 + $0x668] sm:$0xff]
      %v451 = vld [vmem:[%s1 + $0x670] sm:$0xff]
      %v452 = vld [vmem:[%s1 + $0x678] sm:$0xff]
      %v453 = vld [vmem:[%s1 + $0x680] sm:$0xff]
      %v454 = vld [vmem:[%s1 + $0x688] sm:$0xff]
      %v455 = vld [vmem:[%s1 + $0x690] sm:$0xff]
      %v456 = vld [vmem:[%s1 + $0x698] sm:$0xff]
      %v457 = vld [vmem:[%s1 + $0x6a0] sm:$0xff]
      %v458 = vld [vmem:[%s1 + $0x6a8] sm:$0xff]
      %v459 = vld [vmem:[%s1 + $0x6b0] sm:$0xff]
      %v460 = vld [vmem:[%s1 + $0x6b8] sm:$0xff]
      %v461 = vld [vmem:[%s1 + $0x6c0] sm:$0xff]
      %v462 = vld [vmem:[%s1 + $0x6c8] sm:$0xff]
      %v463 = vld [vmem:[%s1 + $0x6d0] sm:$0xff]
      %v464 = vld [vmem:[%s1 + $0x6d8] sm:$0xff]
      %v465 = vld [vmem:[%s1 + $0x6e0] sm:$0xff]
      %v466 = vld [vmem:[%s1 + $0x6e8] sm:$0xff]
      %v467 = vld [vmem:[%s1 + $0x6f0] sm:$0xff]
      %v468 = vld [vmem:[%s1 + $0x6f8] sm:$0xff]
      %469 = vmatprep.subr.mxu0 %v351
      %470 = vmatpush1.msra.mxu0 %v350
      %471 = vmatprep.subr.mxu0 %v344
      %472 = vmatpush1.msra.mxu0 %v343
      %473 = vmatprep.subr.mxu0 %v337
      %474 = vmatpush1.msra.mxu0 %v336
      %475 = vmatprep.subr.mxu0 %v330
      %476 = vmatpush1.msra.mxu0 %v329
      %477 = vmatprep.subr.mxu0 %v323
      %478 = vmatpush1.msra.mxu0 %v322
      %479 = vmatprep.subr.mxu0 %v316
      %480 = vmatpush1.msra.mxu0 %v315
      %481 = vmatprep.subr.mxu0 %v309
      %482 = vmatpush1.msra.mxu0 %v308
      %483 = vmatprep.subr.mxu0 %v302
      %484 = vmatpush1.msra.mxu0 %v301
      %485 = vmatprep.subr.mxu0 %v295
      %486 = vmatpush1.msra.mxu0 %v294
      %487 = vmatprep.subr.mxu0 %v288
      %488 = vmatpush1.msra.mxu0 %v287
      %489 = vmatprep.subr.mxu0 %v281
      %490 = vmatpush1.msra.mxu0 %v280
      %491 = vmatprep.subr.mxu0 %v274
      %492 = vmatpush1.msra.mxu0 %v273
      %493 = vmatprep.subr.mxu0 %v267
      %494 = vmatpush1.msra.mxu0 %v266
      %495 = vmatprep.subr.mxu0 %v260
      %496 = vmatpush1.msra.mxu0 %v259
      %497 = vmatprep.subr.mxu0 %v253
      %498 = vmatpush1.msra.mxu0 %v252
      %499 = vmatprep.subr.mxu0 %v246
      %500 = vmatpush1.msra.mxu0 %v245
      %501 = vmatprep.subr.mxu0 %v463
      %502 = vmatpush2.msra.mxu0 %v462
      %503 = vmatprep.subr.mxu0 %v456
      %504 = vmatpush2.msra.mxu0 %v455
      %505 = vmatprep.subr.mxu0 %v449
      %506 = vmatpush2.msra.mxu0 %v448
      %507 = vmatprep.subr.mxu0 %v442
      %508 = vmatpush2.msra.mxu0 %v441
      %509 = vmatprep.subr.mxu0 %v435
      %510 = vmatpush2.msra.mxu0 %v434
      %511 = vmatprep.subr.mxu0 %v428
      %512 = vmatpush2.msra.mxu0 %v427
      %513 = vmatprep.subr.mxu0 %v421
      %514 = vmatpush2.msra.mxu0 %v420
      %515 = vmatprep.subr.mxu0 %v414
      %516 = vmatpush2.msra.mxu0 %v413
      %517 = vmatprep.subr.mxu0 %v407
      %518 = vmatpush2.msra.mxu0 %v406
      %519 = vmatprep.subr.mxu0 %v400
      %520 = vmatpush2.msra.mxu0 %v399
      %521 = vmatprep.subr.mxu0 %v393
      %522 = vmatpush2.msra.mxu0 %v392
      %523 = vmatprep.subr.mxu0 %v386
      %524 = vmatpush2.msra.mxu0 %v385
      %525 = vmatprep.subr.mxu0 %v379
      %526 = vmatpush2.msra.mxu0 %v378
      %527 = vmatprep.subr.mxu0 %v372
      %528 = vmatpush2.msra.mxu0 %v371
      %529 = vmatprep.subr.mxu0 %v365
      %530 = vmatpush2.msra.mxu0 %v364
      %531 = vmatprep.subr.mxu0 %v358
      %532 = vmatpush2.msra.mxu0 %v357
      %533 = vmatprep.mubr.f32.mxu0 %v180
      %534 = vmatmul.mubr.f32.gmra.mxu0 %v179
      %v535 = vpop.f32.mrf.mxu0
      %v536 = vadd.f32 0.0, %v535
      %v537 = vpop.f32.mrf.mxu0
      %v538 = vadd.f32 0.0, %v537
      %539 = vmatprep.mubr.f32.mxu0 %v182
      %540 = vmatmul.mubr.f32.gmra.mxu0 %v181
      %v541 = vpop.f32.mrf.mxu0
      %v542 = vadd.f32 0.0, %v541
      %v543 = vpop.f32.mrf.mxu0
      %v544 = vadd.f32 0.0, %v543
      %545 = vmatprep.mubr.f32.mxu0 %v184
      %546 = vmatmul.mubr.f32.gmra.mxu0 %v183
      %v547 = vpop.f32.mrf.mxu0
      %v548 = vpop.f32.mrf.mxu0
      %v549 = vadd.f32 0.0, %v548
      %550 = vmatprep.mubr.f32.mxu0 %v186
      %551 = vmatmul.mubr.f32.gmra.mxu0 %v185
      %v552 = vpop.f32.mrf.mxu0
      %v553 = vadd.f32 0.0, %v552
      %v554 = vpop.f32.mrf.mxu0
      %v555 = vadd.f32 0.0, %v554
      %556 = vmatprep.mubr.f32.mxu0 %v188
      %557 = vmatmul.mubr.f32.gmra.mxu0 %v187
      %v558 = vpop.f32.mrf.mxu0
      %v559 = vadd.f32 0.0, %v558
      %v560 = vpop.f32.mrf.mxu0
      %v561 = vadd.f32 0.0, %v560
      %562 = vmatprep.mubr.f32.mxu0 %v190
      %563 = vmatmul.mubr.f32.gmra.mxu0 %v189
      %v564 = vpop.f32.mrf.mxu0
      %v565 = vpop.f32.mrf.mxu0
      %v566 = vadd.f32 0.0, %v565
      %567 = vmatprep.mubr.f32.mxu0 %v192
      %568 = vmatmul.mubr.f32.gmra.mxu0 %v191
      %v569 = vpop.f32.mrf.mxu0
      %v570 = vadd.f32 0.0, %v569
      %v571 = vpop.f32.mrf.mxu0
      %v572 = vadd.f32 0.0, %v571
      %573 = vmatprep.mubr.f32.mxu0 %v194
      %574 = vmatmul.mubr.f32.gmra.mxu0 %v193
      %v575 = vpop.f32.mrf.mxu0
      %v576 = vadd.f32 0.0, %v575
      %v577 = vpop.f32.mrf.mxu0
      %v578 = vadd.f32 0.0, %v577
      %579 = vmatprep.mubr.f32.mxu0 %v196
      %580 = vmatmul.mubr.f32.gmra.mxu0 %v195
      %v581 = vpop.f32.mrf.mxu0
      %v582 = vpop.f32.mrf.mxu0
      %v583 = vadd.f32 0.0, %v582
      %584 = vmatprep.mubr.f32.mxu0 %v198
      %585 = vmatmul.mubr.f32.gmra.mxu0 %v197
      %v586 = vpop.f32.mrf.mxu0
      %v587 = vadd.f32 0.0, %v586
      %v588 = vpop.f32.mrf.mxu0
      %v589 = vadd.f32 0.0, %v588
      %590 = vmatprep.mubr.f32.mxu0 %v200
      %591 = vmatmul.mubr.f32.gmra.mxu0 %v199
      %v592 = vpop.f32.mrf.mxu0
      %v593 = vadd.f32 0.0, %v592
      %v594 = vpop.f32.mrf.mxu0
      %v595 = vadd.f32 0.0, %v594
      %596 = vmatprep.mubr.f32.mxu0 %v202
      %597 = vmatmul.mubr.f32.gmra.mxu0 %v201
      %v598 = vpop.f32.mrf.mxu0
      %v599 = vpop.f32.mrf.mxu0
      %v600 = vadd.f32 0.0, %v599
      %601 = vmatprep.mubr.f32.mxu0 %v204
      %602 = vmatmul.mubr.f32.gmra.mxu0 %v203
      %v603 = vpop.f32.mrf.mxu0
      %v604 = vadd.f32 0.0, %v603
      %v605 = vpop.f32.mrf.mxu0
      %v606 = vadd.f32 0.0, %v605
      %607 = vmatprep.mubr.f32.mxu0 %v206
      %608 = vmatmul.mubr.f32.gmra.mxu0 %v205
      %v609 = vpop.f32.mrf.mxu0
      %v610 = vadd.f32 0.0, %v609
      %v611 = vpop.f32.mrf.mxu0
      %v612 = vadd.f32 0.0, %v611
      %613 = vmatprep.mubr.f32.mxu0 %v208
      %614 = vmatmul.mubr.f32.gmra.mxu0 %v207
      %v615 = vpop.f32.mrf.mxu0
      %v616 = vpop.f32.mrf.mxu0
      %v617 = vadd.f32 0.0, %v616
      %618 = vmatprep.mubr.f32.mxu0 %v210
      %619 = vmatmul.mubr.f32.gmra.mxu0 %v209
      %v620 = vpop.f32.mrf.mxu0
      %v621 = vadd.f32 0.0, %v620
      %v622 = vpop.f32.mrf.mxu0
      %v623 = vadd.f32 0.0, %v622
      %624 = vmatprep.mubr.f32.mxu0 %v212
      %625 = vmatmul.mubr.f32.gmra.mxu0 %v211
      %v626 = vpop.f32.mrf.mxu0
      %v627 = vadd.f32 0.0, %v626
      %v628 = vpop.f32.mrf.mxu0
      %v629 = vadd.f32 0.0, %v628
      %630 = vmatprep.mubr.f32.mxu0 %v214
      %631 = vmatmul.mubr.f32.gmra.mxu0 %v213
      %v632 = vpop.f32.mrf.mxu0
      %v633 = vpop.f32.mrf.mxu0
      %v634 = vadd.f32 0.0, %v633
      %635 = vmatprep.mubr.f32.mxu0 %v216
      %636 = vmatmul.mubr.f32.gmra.mxu0 %v215
      %v637 = vpop.f32.mrf.mxu0
      %v638 = vadd.f32 0.0, %v637
      %v639 = vpop.f32.mrf.mxu0
      %v640 = vadd.f32 0.0, %v639
      %641 = vmatprep.mubr.f32.mxu0 %v218
      %642 = vmatmul.mubr.f32.gmra.mxu0 %v217
      %v643 = vpop.f32.mrf.mxu0
      %v644 = vadd.f32 0.0, %v643
      %v645 = vpop.f32.mrf.mxu0
      %v646 = vadd.f32 0.0, %v645
      %647 = vmatprep.mubr.f32.mxu0 %v220
      %648 = vmatmul.mubr.f32.gmra.mxu0 %v219
      %v649 = vpop.f32.mrf.mxu0
      %v650 = vpop.f32.mrf.mxu0
      %v651 = vadd.f32 0.0, %v650
      %652 = vmatprep.mubr.f32.mxu0 %v222
      %653 = vmatmul.mubr.f32.gmra.mxu0 %v221
      %v654 = vpop.f32.mrf.mxu0
      %v655 = vadd.f32 0.0, %v654
      %v656 = vpop.f32.mrf.mxu0
      %v657 = vadd.f32 0.0, %v656
      %658 = vmatprep.mubr.f32.mxu0 %v224
      %659 = vmatmul.mubr.f32.gmra.mxu0 %v223
      %v660 = vpop.f32.mrf.mxu0
      %v661 = vadd.f32 0.0, %v660
      %v662 = vpop.f32.mrf.mxu0
      %v663 = vadd.f32 0.0, %v662
      %664 = vmatprep.mubr.f32.mxu0 %v226
      %665 = vmatmul.mubr.f32.gmra.mxu0 %v225
      %v666 = vpop.f32.mrf.mxu0
      %v667 = vpop.f32.mrf.mxu0
      %v668 = vadd.f32 0.0, %v667
      %669 = vmatprep.mubr.f32.mxu0 %v228
      %670 = vmatmul.mubr.f32.gmra.mxu0 %v227
      %v671 = vpop.f32.mrf.mxu0
      %v672 = vadd.f32 0.0, %v671
      %v673 = vpop.f32.mrf.mxu0
      %v674 = vadd.f32 0.0, %v673
      %675 = vmatprep.mubr.f32.mxu0 %v230
      %676 = vmatmul.mubr.f32.gmra.mxu0 %v229
      %v677 = vpop.f32.mrf.mxu0
      %v678 = vadd.f32 0.0, %v677
      %v679 = vpop.f32.mrf.mxu0
      %v680 = vadd.f32 0.0, %v679
      %681 = vmatprep.mubr.f32.mxu0 %v232
      %682 = vmatmul.mubr.f32.gmra.mxu0 %v231
      %v683 = vpop.f32.mrf.mxu0
      %v684 = vpop.f32.mrf.mxu0
      %v685 = vadd.f32 0.0, %v684
      %686 = vmatprep.mubr.f32.mxu0 %v234
      %687 = vmatmul.mubr.f32.gmra.mxu0 %v233
      %v688 = vpop.f32.mrf.mxu0
      %v689 = vadd.f32 0.0, %v688
      %v690 = vpop.f32.mrf.mxu0
      %v691 = vadd.f32 0.0, %v690
      %692 = vmatprep.mubr.f32.mxu0 %v236
      %693 = vmatmul.mubr.f32.gmra.mxu0 %v235
      %v694 = vpop.f32.mrf.mxu0
      %v695 = vadd.f32 0.0, %v694
      %v696 = vpop.f32.mrf.mxu0
      %v697 = vadd.f32 0.0, %v696
      %698 = vmatprep.mubr.f32.mxu0 %v238
      %699 = vmatmul.mubr.f32.gmra.mxu0 %v237
      %v700 = vpop.f32.mrf.mxu0
      %v701 = vpop.f32.mrf.mxu0
      %v702 = vadd.f32 0.0, %v701
      %703 = vmatprep.mubr.f32.mxu0 %v240
      %704 = vmatmul.mubr.f32.gmra.mxu0 %v239
      %v705 = vpop.f32.mrf.mxu0
      %v706 = vadd.f32 0.0, %v705
      %v707 = vpop.f32.mrf.mxu0
      %v708 = vadd.f32 0.0, %v707
      %709 = vmatprep.mubr.f32.mxu0 %v242
      %710 = vmatmul.mubr.f32.gmra.mxu0 %v241
      %v711 = vpop.f32.mrf.mxu0
      %v712 = vadd.f32 0.0, %v711
      %v713 = vpop.f32.mrf.mxu0
      %v714 = vadd.f32 0.0, %v713
      %715 = vmatprep.mubr.f32.mxu0 %v244
      %716 = vmatmul.mubr.f32.gmra.mxu0 %v243
      %v717 = vpop.f32.mrf.mxu0
      %v718 = vpop.f32.mrf.mxu0
      %v719 = vadd.f32 0.0, %v718
      %720 = vdwg.mxu0
      %721 = vmatprep.subr.mxu0 %v353
      %722 = vmatpush1.msra.mxu0 %v352
      %723 = vmatprep.subr.mxu0 %v346
      %724 = vmatpush1.msra.mxu0 %v345
      %725 = vmatprep.subr.mxu0 %v339
      %726 = vmatpush1.msra.mxu0 %v338
      %727 = vmatprep.subr.mxu0 %v332
      %728 = vmatpush1.msra.mxu0 %v331
      %729 = vmatprep.subr.mxu0 %v325
      %730 = vmatpush1.msra.mxu0 %v324
      %731 = vmatprep.subr.mxu0 %v318
      %732 = vmatpush1.msra.mxu0 %v317
      %733 = vmatprep.subr.mxu0 %v311
      %734 = vmatpush1.msra.mxu0 %v310
      %735 = vmatprep.subr.mxu0 %v304
      %736 = vmatpush1.msra.mxu0 %v303
      %737 = vmatprep.subr.mxu0 %v297
      %738 = vmatpush1.msra.mxu0 %v296
      %739 = vmatprep.subr.mxu0 %v290
      %740 = vmatpush1.msra.mxu0 %v289
      %741 = vmatprep.subr.mxu0 %v283
      %742 = vmatpush1.msra.mxu0 %v282
      %743 = vmatprep.subr.mxu0 %v276
      %744 = vmatpush1.msra.mxu0 %v275
      %745 = vmatprep.subr.mxu0 %v269
      %746 = vmatpush1.msra.mxu0 %v268
      %747 = vmatprep.subr.mxu0 %v262
      %748 = vmatpush1.msra.mxu0 %v261
      %749 = vmatprep.subr.mxu0 %v255
      %750 = vmatpush1.msra.mxu0 %v254
      %751 = vmatprep.subr.mxu0 %v248
      %752 = vmatpush1.msra.mxu0 %v247
      %753 = vmatprep.subr.mxu0 %v465
      %754 = vmatpush2.msra.mxu0 %v464
      %755 = vmatprep.subr.mxu0 %v458
      %756 = vmatpush2.msra.mxu0 %v457
      %757 = vmatprep.subr.mxu0 %v451
      %758 = vmatpush2.msra.mxu0 %v450
      %759 = vmatprep.subr.mxu0 %v444
      %760 = vmatpush2.msra.mxu0 %v443
      %761 = vmatprep.subr.mxu0 %v437
      %762 = vmatpush2.msra.mxu0 %v436
      %763 = vmatprep.subr.mxu0 %v430
      %764 = vmatpush2.msra.mxu0 %v429
      %765 = vmatprep.subr.mxu0 %v423
      %766 = vmatpush2.msra.mxu0 %v422
      %767 = vmatprep.subr.mxu0 %v416
      %768 = vmatpush2.msra.mxu0 %v415
      %769 = vmatprep.subr.mxu0 %v409
      %770 = vmatpush2.msra.mxu0 %v408
      %771 = vmatprep.subr.mxu0 %v402
      %772 = vmatpush2.msra.mxu0 %v401
      %773 = vmatprep.subr.mxu0 %v395
      %774 = vmatpush2.msra.mxu0 %v394
      %775 = vmatprep.subr.mxu0 %v388
      %776 = vmatpush2.msra.mxu0 %v387
      %777 = vmatprep.subr.mxu0 %v381
      %778 = vmatpush2.msra.mxu0 %v380
      %779 = vmatprep.subr.mxu0 %v374
      %780 = vmatpush2.msra.mxu0 %v373
      %781 = vmatprep.subr.mxu0 %v367
      %782 = vmatpush2.msra.mxu0 %v366
      %783 = vmatprep.subr.mxu0 %v360
      %784 = vmatpush2.msra.mxu0 %v359
      %785 = vmatprep.mubr.f32.mxu0 %v180
      %786 = vmatmul.mubr.f32.gmra.mxu0 %v179
      %v787 = vpop.f32.mrf.mxu0
      %v788 = vadd.f32 0.0, %v787
      %v789 = vpop.f32.mrf.mxu0
      %v790 = vadd.f32 0.0, %v789
      %791 = vmatprep.mubr.f32.mxu0 %v182
      %792 = vmatmul.mubr.f32.gmra.mxu0 %v181
      %v793 = vpop.f32.mrf.mxu0
      %v794 = vadd.f32 0.0, %v793
      %v795 = vpop.f32.mrf.mxu0
      %v796 = vadd.f32 0.0, %v795
      %797 = vmatprep.mubr.f32.mxu0 %v184
      %798 = vmatmul.mubr.f32.gmra.mxu0 %v183
      %v799 = vpop.f32.mrf.mxu0
      %v800 = vadd.f32 0.0, %v799
      %v801 = vpop.f32.mrf.mxu0
      %v802 = vadd.f32 0.0, %v801
      %803 = vmatprep.mubr.f32.mxu0 %v186
      %804 = vmatmul.mubr.f32.gmra.mxu0 %v185
      %v805 = vpop.f32.mrf.mxu0
      %v806 = vadd.f32 0.0, %v805
      %v807 = vpop.f32.mrf.mxu0
      %v808 = vadd.f32 0.0, %v807
      %809 = vmatprep.mubr.f32.mxu0 %v188
      %810 = vmatmul.mubr.f32.gmra.mxu0 %v187
      %v811 = vpop.f32.mrf.mxu0
      %v812 = vadd.f32 0.0, %v811
      %v813 = vpop.f32.mrf.mxu0
      %v814 = vadd.f32 0.0, %v813
      %815 = vmatprep.mubr.f32.mxu0 %v190
      %816 = vmatmul.mubr.f32.gmra.mxu0 %v189
      %v817 = vpop.f32.mrf.mxu0
      %v818 = vadd.f32 0.0, %v817
      %v819 = vpop.f32.mrf.mxu0
      %v820 = vadd.f32 0.0, %v819
      %821 = vmatprep.mubr.f32.mxu0 %v192
      %822 = vmatmul.mubr.f32.gmra.mxu0 %v191
      %v823 = vpop.f32.mrf.mxu0
      %v824 = vadd.f32 0.0, %v823
      %v825 = vpop.f32.mrf.mxu0
      %v826 = vadd.f32 0.0, %v825
      %827 = vmatprep.mubr.f32.mxu0 %v194
      %828 = vmatmul.mubr.f32.gmra.mxu0 %v193
      %v829 = vpop.f32.mrf.mxu0
      %v830 = vadd.f32 0.0, %v829
      %v831 = vpop.f32.mrf.mxu0
      %v832 = vadd.f32 0.0, %v831
      %833 = vmatprep.mubr.f32.mxu0 %v196
      %834 = vmatmul.mubr.f32.gmra.mxu0 %v195
      %v835 = vpop.f32.mrf.mxu0
      %v836 = vadd.f32 0.0, %v835
      %v837 = vpop.f32.mrf.mxu0
      %v838 = vadd.f32 0.0, %v837
      %839 = vmatprep.mubr.f32.mxu0 %v198
      %840 = vmatmul.mubr.f32.gmra.mxu0 %v197
      %v841 = vpop.f32.mrf.mxu0
      %v842 = vadd.f32 0.0, %v841
      %v843 = vpop.f32.mrf.mxu0
      %v844 = vadd.f32 0.0, %v843
      %845 = vmatprep.mubr.f32.mxu0 %v200
      %846 = vmatmul.mubr.f32.gmra.mxu0 %v199
      %v847 = vpop.f32.mrf.mxu0
      %v848 = vadd.f32 0.0, %v847
      %v849 = vpop.f32.mrf.mxu0
      %v850 = vadd.f32 0.0, %v849
      %851 = vmatprep.mubr.f32.mxu0 %v202
      %852 = vmatmul.mubr.f32.gmra.mxu0 %v201
      %v853 = vpop.f32.mrf.mxu0
      %v854 = vadd.f32 0.0, %v853
      %v855 = vpop.f32.mrf.mxu0
      %v856 = vadd.f32 0.0, %v855
      %857 = vmatprep.mubr.f32.mxu0 %v204
      %858 = vmatmul.mubr.f32.gmra.mxu0 %v203
      %v859 = vpop.f32.mrf.mxu0
      %v860 = vadd.f32 0.0, %v859
      %v861 = vpop.f32.mrf.mxu0
      %v862 = vadd.f32 0.0, %v861
      %863 = vmatprep.mubr.f32.mxu0 %v206
      %864 = vmatmul.mubr.f32.gmra.mxu0 %v205
      %v865 = vpop.f32.mrf.mxu0
      %v866 = vadd.f32 0.0, %v865
      %v867 = vpop.f32.mrf.mxu0
      %v868 = vadd.f32 0.0, %v867
      %869 = vmatprep.mubr.f32.mxu0 %v208
      %870 = vmatmul.mubr.f32.gmra.mxu0 %v207
      %v871 = vpop.f32.mrf.mxu0
      %v872 = vadd.f32 0.0, %v871
      %v873 = vpop.f32.mrf.mxu0
      %v874 = vadd.f32 0.0, %v873
      %875 = vmatprep.mubr.f32.mxu0 %v210
      %876 = vmatmul.mubr.f32.gmra.mxu0 %v209
      %v877 = vpop.f32.mrf.mxu0
      %v878 = vadd.f32 0.0, %v877
      %v879 = vpop.f32.mrf.mxu0
      %v880 = vadd.f32 0.0, %v879
      %881 = vmatprep.mubr.f32.mxu0 %v212
      %882 = vmatmul.mubr.f32.gmra.mxu0 %v211
      %v883 = vpop.f32.mrf.mxu0
      %v884 = vadd.f32 0.0, %v883
      %v885 = vpop.f32.mrf.mxu0
      %v886 = vadd.f32 0.0, %v885
      %887 = vmatprep.mubr.f32.mxu0 %v214
      %888 = vmatmul.mubr.f32.gmra.mxu0 %v213
      %v889 = vpop.f32.mrf.mxu0
      %v890 = vadd.f32 0.0, %v889
      %v891 = vpop.f32.mrf.mxu0
      %v892 = vadd.f32 0.0, %v891
      %893 = vmatprep.mubr.f32.mxu0 %v216
      %894 = vmatmul.mubr.f32.gmra.mxu0 %v215
      %v895 = vpop.f32.mrf.mxu0
      %v896 = vadd.f32 0.0, %v895
      %v897 = vpop.f32.mrf.mxu0
      %v898 = vadd.f32 0.0, %v897
      %899 = vmatprep.mubr.f32.mxu0 %v218
      %900 = vmatmul.mubr.f32.gmra.mxu0 %v217
      %v901 = vpop.f32.mrf.mxu0
      %v902 = vadd.f32 0.0, %v901
      %v903 = vpop.f32.mrf.mxu0
      %v904 = vadd.f32 0.0, %v903
      %905 = vmatprep.mubr.f32.mxu0 %v220
      %906 = vmatmul.mubr.f32.gmra.mxu0 %v219
      %v907 = vpop.f32.mrf.mxu0
      %v908 = vadd.f32 0.0, %v907
      %v909 = vpop.f32.mrf.mxu0
      %v910 = vadd.f32 0.0, %v909
      %911 = vmatprep.mubr.f32.mxu0 %v222
      %912 = vmatmul.mubr.f32.gmra.mxu0 %v221
      %v913 = vpop.f32.mrf.mxu0
      %v914 = vadd.f32 0.0, %v913
      %v915 = vpop.f32.mrf.mxu0
      %v916 = vadd.f32 0.0, %v915
      %917 = vmatprep.mubr.f32.mxu0 %v224
      %918 = vmatmul.mubr.f32.gmra.mxu0 %v223
      %v919 = vpop.f32.mrf.mxu0
      %v920 = vadd.f32 0.0, %v919
      %v921 = vpop.f32.mrf.mxu0
      %v922 = vadd.f32 0.0, %v921
      %923 = vmatprep.mubr.f32.mxu0 %v226
      %924 = vmatmul.mubr.f32.gmra.mxu0 %v225
      %v925 = vpop.f32.mrf.mxu0
      %v926 = vadd.f32 0.0, %v925
      %v927 = vpop.f32.mrf.mxu0
      %v928 = vadd.f32 0.0, %v927
      %929 = vmatprep.mubr.f32.mxu0 %v228
      %930 = vmatmul.mubr.f32.gmra.mxu0 %v227
      %v931 = vpop.f32.mrf.mxu0
      %v932 = vadd.f32 0.0, %v931
      %v933 = vpop.f32.mrf.mxu0
      %v934 = vadd.f32 0.0, %v933
      %935 = vmatprep.mubr.f32.mxu0 %v230
      %936 = vmatmul.mubr.f32.gmra.mxu0 %v229
      %v937 = vpop.f32.mrf.mxu0
      %v938 = vadd.f32 0.0, %v937
      %v939 = vpop.f32.mrf.mxu0
      %v940 = vadd.f32 0.0, %v939
      %941 = vmatprep.mubr.f32.mxu0 %v232
      %942 = vmatmul.mubr.f32.gmra.mxu0 %v231
      %v943 = vpop.f32.mrf.mxu0
      %v944 = vadd.f32 0.0, %v943
      %v945 = vpop.f32.mrf.mxu0
      %v946 = vadd.f32 0.0, %v945
      %947 = vmatprep.mubr.f32.mxu0 %v234
      %948 = vmatmul.mubr.f32.gmra.mxu0 %v233
      %v949 = vpop.f32.mrf.mxu0
      %v950 = vadd.f32 0.0, %v949
      %v951 = vpop.f32.mrf.mxu0
      %v952 = vadd.f32 0.0, %v951
      %953 = vmatprep.mubr.f32.mxu0 %v236
      %954 = vmatmul.mubr.f32.gmra.mxu0 %v235
      %v955 = vpop.f32.mrf.mxu0
      %v956 = vadd.f32 0.0, %v955
      %v957 = vpop.f32.mrf.mxu0
      %v958 = vadd.f32 0.0, %v957
      %959 = vmatprep.mubr.f32.mxu0 %v238
      %960 = vmatmul.mubr.f32.gmra.mxu0 %v237
      %v961 = vpop.f32.mrf.mxu0
      %v962 = vadd.f32 0.0, %v961
      %v963 = vpop.f32.mrf.mxu0
      %v964 = vadd.f32 0.0, %v963
      %965 = vmatprep.mubr.f32.mxu0 %v240
      %966 = vmatmul.mubr.f32.gmra.mxu0 %v239
      %v967 = vpop.f32.mrf.mxu0
      %v968 = vadd.f32 0.0, %v967
      %v969 = vpop.f32.mrf.mxu0
      %v970 = vadd.f32 0.0, %v969
      %971 = vmatprep.mubr.f32.mxu0 %v242
      %972 = vmatmul.mubr.f32.gmra.mxu0 %v241
      %v973 = vpop.f32.mrf.mxu0
      %v974 = vadd.f32 0.0, %v973
      %v975 = vpop.f32.mrf.mxu0
      %v976 = vadd.f32 0.0, %v975
      %977 = vmatprep.mubr.f32.mxu0 %v244
      %978 = vmatmul.mubr.f32.gmra.mxu0 %v243
      %v979 = vpop.f32.mrf.mxu0
      %v980 = vadd.f32 0.0, %v979
      %v981 = vpop.f32.mrf.mxu0
      %v982 = vadd.f32 0.0, %v981
      %983 = vdwg.mxu0
      %984 = vmatprep.subr.mxu0 %v355
      %985 = vmatpush1.msra.mxu0 %v354
      %986 = vmatprep.subr.mxu0 %v348
      %987 = vmatpush1.msra.mxu0 %v347
      %988 = vmatprep.subr.mxu0 %v341
      %989 = vmatpush1.msra.mxu0 %v340
      %990 = vmatprep.subr.mxu0 %v334
      %991 = vmatpush1.msra.mxu0 %v333
      %992 = vmatprep.subr.mxu0 %v327
      %993 = vmatpush1.msra.mxu0 %v326
      %994 = vmatprep.subr.mxu0 %v320
      %995 = vmatpush1.msra.mxu0 %v319
      %996 = vmatprep.subr.mxu0 %v313
      %997 = vmatpush1.msra.mxu0 %v312
      %998 = vmatprep.subr.mxu0 %v306
      %999 = vmatpush1.msra.mxu0 %v305
      %1000 = vmatprep.subr.mxu0 %v299
      %1001 = vmatpush1.msra.mxu0 %v298
      %1002 = vmatprep.subr.mxu0 %v292
      %1003 = vmatpush1.msra.mxu0 %v291
      %1004 = vmatprep.subr.mxu0 %v285
      %1005 = vmatpush1.msra.mxu0 %v284
      %1006 = vmatprep.subr.mxu0 %v278
      %1007 = vmatpush1.msra.mxu0 %v277
      %1008 = vmatprep.subr.mxu0 %v271
      %1009 = vmatpush1.msra.mxu0 %v270
      %1010 = vmatprep.subr.mxu0 %v264
      %1011 = vmatpush1.msra.mxu0 %v263
      %1012 = vmatprep.subr.mxu0 %v257
      %1013 = vmatpush1.msra.mxu0 %v256
      %1014 = vmatprep.subr.mxu0 %v250
      %1015 = vmatpush1.msra.mxu0 %v249
      %1016 = vmatprep.subr.mxu0 %v467
      %1017 = vmatpush2.msra.mxu0 %v466
      %1018 = vmatprep.subr.mxu0 %v460
      %1019 = vmatpush2.msra.mxu0 %v459
      %1020 = vmatprep.subr.mxu0 %v453
      %1021 = vmatpush2.msra.mxu0 %v452
      %1022 = vmatprep.subr.mxu0 %v446
      %1023 = vmatpush2.msra.mxu0 %v445
      %1024 = vmatprep.subr.mxu0 %v439
      %1025 = vmatpush2.msra.mxu0 %v438
      %1026 = vmatprep.subr.mxu0 %v432
      %1027 = vmatpush2.msra.mxu0 %v431
      %1028 = vmatprep.subr.mxu0 %v425
      %1029 = vmatpush2.msra.mxu0 %v424
      %1030 = vmatprep.subr.mxu0 %v418
      %1031 = vmatpush2.msra.mxu0 %v417
      %1032 = vmatprep.subr.mxu0 %v411
      %1033 = vmatpush2.msra.mxu0 %v410
      %1034 = vmatprep.subr.mxu0 %v404
      %1035 = vmatpush2.msra.mxu0 %v403
      %1036 = vmatprep.subr.mxu0 %v397
      %1037 = vmatpush2.msra.mxu0 %v396
      %1038 = vmatprep.subr.mxu0 %v390
      %1039 = vmatpush2.msra.mxu0 %v389
      %1040 = vmatprep.subr.mxu0 %v383
      %1041 = vmatpush2.msra.mxu0 %v382
      %1042 = vmatprep.subr.mxu0 %v376
      %1043 = vmatpush2.msra.mxu0 %v375
      %1044 = vmatprep.subr.mxu0 %v369
      %1045 = vmatpush2.msra.mxu0 %v368
      %1046 = vmatprep.subr.mxu0 %v362
      %1047 = vmatpush2.msra.mxu0 %v361
      %1048 = vmatprep.mubr.f32.mxu0 %v180
      %1049 = vmatmul.mubr.f32.gmra.mxu0 %v179
      %v1050 = vpop.f32.mrf.mxu0
      %v1051 = vadd.f32 0.0, %v1050
      %v1052 = vpop.f32.mrf.mxu0
      %v1053 = vadd.f32 0.0, %v1052
      %1054 = vmatprep.mubr.f32.mxu0 %v182
      %1055 = vmatmul.mubr.f32.gmra.mxu0 %v181
      %v1056 = vpop.f32.mrf.mxu0
      %v1057 = vadd.f32 0.0, %v1056
      %v1058 = vpop.f32.mrf.mxu0
      %v1059 = vadd.f32 0.0, %v1058
      %1060 = vmatprep.mubr.f32.mxu0 %v184
      %1061 = vmatmul.mubr.f32.gmra.mxu0 %v183
      %v1062 = vpop.f32.mrf.mxu0
      %v1063 = vadd.f32 0.0, %v1062
      %v1064 = vpop.f32.mrf.mxu0
      %v1065 = vadd.f32 0.0, %v1064
      %1066 = vmatprep.mubr.f32.mxu0 %v186
      %1067 = vmatmul.mubr.f32.gmra.mxu0 %v185
      %v1068 = vpop.f32.mrf.mxu0
      %v1069 = vadd.f32 0.0, %v1068
      %v1070 = vpop.f32.mrf.mxu0
      %v1071 = vadd.f32 0.0, %v1070
      %1072 = vmatprep.mubr.f32.mxu0 %v188
      %1073 = vmatmul.mubr.f32.gmra.mxu0 %v187
      %v1074 = vpop.f32.mrf.mxu0
      %v1075 = vadd.f32 0.0, %v1074
      %v1076 = vpop.f32.mrf.mxu0
      %v1077 = vadd.f32 0.0, %v1076
      %1078 = vmatprep.mubr.f32.mxu0 %v190
      %1079 = vmatmul.mubr.f32.gmra.mxu0 %v189
      %v1080 = vpop.f32.mrf.mxu0
      %v1081 = vadd.f32 0.0, %v1080
      %v1082 = vpop.f32.mrf.mxu0
      %v1083 = vadd.f32 0.0, %v1082
      %1084 = vmatprep.mubr.f32.mxu0 %v192
      %1085 = vmatmul.mubr.f32.gmra.mxu0 %v191
      %v1086 = vpop.f32.mrf.mxu0
      %v1087 = vadd.f32 0.0, %v1086
      %v1088 = vpop.f32.mrf.mxu0
      %v1089 = vadd.f32 0.0, %v1088
      %1090 = vmatprep.mubr.f32.mxu0 %v194
      %1091 = vmatmul.mubr.f32.gmra.mxu0 %v193
      %v1092 = vpop.f32.mrf.mxu0
      %v1093 = vadd.f32 0.0, %v1092
      %v1094 = vpop.f32.mrf.mxu0
      %v1095 = vadd.f32 0.0, %v1094
      %1096 = vmatprep.mubr.f32.mxu0 %v196
      %1097 = vmatmul.mubr.f32.gmra.mxu0 %v195
      %v1098 = vpop.f32.mrf.mxu0
      %v1099 = vadd.f32 0.0, %v1098
      %v1100 = vpop.f32.mrf.mxu0
      %v1101 = vadd.f32 0.0, %v1100
      %1102 = vmatprep.mubr.f32.mxu0 %v198
      %1103 = vmatmul.mubr.f32.gmra.mxu0 %v197
      %v1104 = vpop.f32.mrf.mxu0
      %v1105 = vadd.f32 0.0, %v1104
      %v1106 = vpop.f32.mrf.mxu0
      %v1107 = vadd.f32 0.0, %v1106
      %1108 = vmatprep.mubr.f32.mxu0 %v200
      %1109 = vmatmul.mubr.f32.gmra.mxu0 %v199
      %v1110 = vpop.f32.mrf.mxu0
      %v1111 = vadd.f32 0.0, %v1110
      %v1112 = vpop.f32.mrf.mxu0
      %v1113 = vadd.f32 0.0, %v1112
      %1114 = vmatprep.mubr.f32.mxu0 %v202
      %1115 = vmatmul.mubr.f32.gmra.mxu0 %v201
      %v1116 = vpop.f32.mrf.mxu0
      %v1117 = vadd.f32 0.0, %v1116
      %v1118 = vpop.f32.mrf.mxu0
      %v1119 = vadd.f32 0.0, %v1118
      %1120 = vmatprep.mubr.f32.mxu0 %v204
      %1121 = vmatmul.mubr.f32.gmra.mxu0 %v203
      %v1122 = vpop.f32.mrf.mxu0
      %v1123 = vadd.f32 0.0, %v1122
      %v1124 = vpop.f32.mrf.mxu0
      %v1125 = vadd.f32 0.0, %v1124
      %1126 = vmatprep.mubr.f32.mxu0 %v206
      %1127 = vmatmul.mubr.f32.gmra.mxu0 %v205
      %v1128 = vpop.f32.mrf.mxu0
      %v1129 = vadd.f32 0.0, %v1128
      %v1130 = vpop.f32.mrf.mxu0
      %v1131 = vadd.f32 0.0, %v1130
      %1132 = vmatprep.mubr.f32.mxu0 %v208
      %1133 = vmatmul.mubr.f32.gmra.mxu0 %v207
      %v1134 = vpop.f32.mrf.mxu0
      %v1135 = vadd.f32 0.0, %v1134
      %v1136 = vpop.f32.mrf.mxu0
      %v1137 = vadd.f32 0.0, %v1136
      %1138 = vmatprep.mubr.f32.mxu0 %v210
      %1139 = vmatmul.mubr.f32.gmra.mxu0 %v209
      %v1140 = vpop.f32.mrf.mxu0
      %v1141 = vadd.f32 0.0, %v1140
      %v1142 = vpop.f32.mrf.mxu0
      %v1143 = vadd.f32 0.0, %v1142
      %1144 = vmatprep.mubr.f32.mxu0 %v212
      %1145 = vmatmul.mubr.f32.gmra.mxu0 %v211
      %v1146 = vpop.f32.mrf.mxu0
      %v1147 = vadd.f32 0.0, %v1146
      %v1148 = vpop.f32.mrf.mxu0
      %v1149 = vadd.f32 0.0, %v1148
      %1150 = vmatprep.mubr.f32.mxu0 %v214
      %1151 = vmatmul.mubr.f32.gmra.mxu0 %v213
      %v1152 = vpop.f32.mrf.mxu0
      %v1153 = vadd.f32 0.0, %v1152
      %v1154 = vpop.f32.mrf.mxu0
      %v1155 = vadd.f32 0.0, %v1154
      %1156 = vmatprep.mubr.f32.mxu0 %v216
      %1157 = vmatmul.mubr.f32.gmra.mxu0 %v215
      %v1158 = vpop.f32.mrf.mxu0
      %v1159 = vadd.f32 0.0, %v1158
      %v1160 = vpop.f32.mrf.mxu0
      %v1161 = vadd.f32 0.0, %v1160
      %1162 = vmatprep.mubr.f32.mxu0 %v218
      %1163 = vmatmul.mubr.f32.gmra.mxu0 %v217
      %v1164 = vpop.f32.mrf.mxu0
      %v1165 = vadd.f32 0.0, %v1164
      %v1166 = vpop.f32.mrf.mxu0
      %v1167 = vadd.f32 0.0, %v1166
      %1168 = vmatprep.mubr.f32.mxu0 %v220
      %1169 = vmatmul.mubr.f32.gmra.mxu0 %v219
      %v1170 = vpop.f32.mrf.mxu0
      %v1171 = vadd.f32 0.0, %v1170
      %v1172 = vpop.f32.mrf.mxu0
      %v1173 = vadd.f32 0.0, %v1172
      %1174 = vmatprep.mubr.f32.mxu0 %v222
      %1175 = vmatmul.mubr.f32.gmra.mxu0 %v221
      %v1176 = vpop.f32.mrf.mxu0
      %v1177 = vadd.f32 0.0, %v1176
      %v1178 = vpop.f32.mrf.mxu0
      %v1179 = vadd.f32 0.0, %v1178
      %1180 = vmatprep.mubr.f32.mxu0 %v224
      %1181 = vmatmul.mubr.f32.gmra.mxu0 %v223
      %v1182 = vpop.f32.mrf.mxu0
      %v1183 = vadd.f32 0.0, %v1182
      %v1184 = vpop.f32.mrf.mxu0
      %v1185 = vadd.f32 0.0, %v1184
      %1186 = vmatprep.mubr.f32.mxu0 %v226
      %1187 = vmatmul.mubr.f32.gmra.mxu0 %v225
      %v1188 = vpop.f32.mrf.mxu0
      %v1189 = vadd.f32 0.0, %v1188
      %v1190 = vpop.f32.mrf.mxu0
      %v1191 = vadd.f32 0.0, %v1190
      %1192 = vmatprep.mubr.f32.mxu0 %v228
      %1193 = vmatmul.mubr.f32.gmra.mxu0 %v227
      %v1194 = vpop.f32.mrf.mxu0
      %v1195 = vadd.f32 0.0, %v1194
      %v1196 = vpop.f32.mrf.mxu0
      %v1197 = vadd.f32 0.0, %v1196
      %1198 = vmatprep.mubr.f32.mxu0 %v230
      %1199 = vmatmul.mubr.f32.gmra.mxu0 %v229
      %v1200 = vpop.f32.mrf.mxu0
      %v1201 = vadd.f32 0.0, %v1200
      %v1202 = vpop.f32.mrf.mxu0
      %v1203 = vadd.f32 0.0, %v1202
      %1204 = vmatprep.mubr.f32.mxu0 %v232
      %1205 = vmatmul.mubr.f32.gmra.mxu0 %v231
      %v1206 = vpop.f32.mrf.mxu0
      %v1207 = vadd.f32 0.0, %v1206
      %v1208 = vpop.f32.mrf.mxu0
      %v1209 = vadd.f32 0.0, %v1208
      %1210 = vmatprep.mubr.f32.mxu0 %v234
      %1211 = vmatmul.mubr.f32.gmra.mxu0 %v233
      %v1212 = vpop.f32.mrf.mxu0
      %v1213 = vadd.f32 0.0, %v1212
      %v1214 = vpop.f32.mrf.mxu0
      %v1215 = vadd.f32 0.0, %v1214
      %1216 = vmatprep.mubr.f32.mxu0 %v236
      %1217 = vmatmul.mubr.f32.gmra.mxu0 %v235
      %v1218 = vpop.f32.mrf.mxu0
      %v1219 = vadd.f32 0.0, %v1218
      %v1220 = vpop.f32.mrf.mxu0
      %v1221 = vadd.f32 0.0, %v1220
      %1222 = vmatprep.mubr.f32.mxu0 %v238
      %1223 = vmatmul.mubr.f32.gmra.mxu0 %v237
      %v1224 = vpop.f32.mrf.mxu0
      %v1225 = vadd.f32 0.0, %v1224
      %v1226 = vpop.f32.mrf.mxu0
      %v1227 = vadd.f32 0.0, %v1226
      %1228 = vmatprep.mubr.f32.mxu0 %v240
      %1229 = vmatmul.mubr.f32.gmra.mxu0 %v239
      %v1230 = vpop.f32.mrf.mxu0
      %v1231 = vadd.f32 0.0, %v1230
      %v1232 = vpop.f32.mrf.mxu0
      %v1233 = vadd.f32 0.0, %v1232
      %1234 = vmatprep.mubr.f32.mxu0 %v242
      %1235 = vmatmul.mubr.f32.gmra.mxu0 %v241
      %v1236 = vpop.f32.mrf.mxu0
      %v1237 = vadd.f32 0.0, %v1236
      %v1238 = vpop.f32.mrf.mxu0
      %v1239 = vadd.f32 0.0, %v1238
      %1240 = vmatprep.mubr.f32.mxu0 %v244
      %1241 = vmatmul.mubr.f32.gmra.mxu0 %v243
      %v1242 = vpop.f32.mrf.mxu0
      %v1243 = vadd.f32 0.0, %v1242
      %v1244 = vpop.f32.mrf.mxu0
      %v1245 = vadd.f32 0.0, %v1244
      %1246 = vdwg.mxu0
      %1247 = vmatprep.subr.mxu0 0.0
      %1248 = vmatpush1.msra.mxu0 %v356
      %1249 = vmatprep.subr.mxu0 0.0
      %1250 = vmatpush1.msra.mxu0 %v349
      %1251 = vmatprep.subr.mxu0 0.0
      %1252 = vmatpush1.msra.mxu0 %v342
      %1253 = vmatprep.subr.mxu0 0.0
      %1254 = vmatpush1.msra.mxu0 %v335
      %1255 = vmatprep.subr.mxu0 0.0
      %1256 = vmatpush1.msra.mxu0 %v328
      %1257 = vmatprep.subr.mxu0 0.0
      %1258 = vmatpush1.msra.mxu0 %v321
      %1259 = vmatprep.subr.mxu0 0.0
      %1260 = vmatpush1.msra.mxu0 %v314
      %1261 = vmatprep.subr.mxu0 0.0
      %1262 = vmatpush1.msra.mxu0 %v307
      %1263 = vmatprep.subr.mxu0 0.0
      %1264 = vmatpush1.msra.mxu0 %v300
      %1265 = vmatprep.subr.mxu0 0.0
      %1266 = vmatpush1.msra.mxu0 %v293
      %1267 = vmatprep.subr.mxu0 0.0
      %1268 = vmatpush1.msra.mxu0 %v286
      %1269 = vmatprep.subr.mxu0 0.0
      %1270 = vmatpush1.msra.mxu0 %v279
      %1271 = vmatprep.subr.mxu0 0.0
      %1272 = vmatpush1.msra.mxu0 %v272
      %1273 = vmatprep.subr.mxu0 0.0
      %1274 = vmatpush1.msra.mxu0 %v265
      %1275 = vmatprep.subr.mxu0 0.0
      %1276 = vmatpush1.msra.mxu0 %v258
      %1277 = vmatprep.subr.mxu0 0.0
      %1278 = vmatpush1.msra.mxu0 %v251
      %1279 = vmatprep.subr.mxu0 0.0
      %1280 = vmatpush2.msra.mxu0 %v468
      %1281 = vmatprep.subr.mxu0 0.0
      %1282 = vmatpush2.msra.mxu0 %v461
      %1283 = vmatprep.subr.mxu0 0.0
      %1284 = vmatpush2.msra.mxu0 %v454
      %1285 = vmatprep.subr.mxu0 0.0
      %1286 = vmatpush2.msra.mxu0 %v447
      %1287 = vmatprep.subr.mxu0 0.0
      %1288 = vmatpush2.msra.mxu0 %v440
      %1289 = vmatprep.subr.mxu0 0.0
      %1290 = vmatpush2.msra.mxu0 %v433
      %1291 = vmatprep.subr.mxu0 0.0
      %1292 = vmatpush2.msra.mxu0 %v426
      %1293 = vmatprep.subr.mxu0 0.0
      %1294 = vmatpush2.msra.mxu0 %v419
      %1295 = vmatprep.subr.mxu0 0.0
      %1296 = vmatpush2.msra.mxu0 %v412
      %1297 = vmatprep.subr.mxu0 0.0
      %1298 = vmatpush2.msra.mxu0 %v405
      %1299 = vmatprep.subr.mxu0 0.0
      %1300 = vmatpush2.msra.mxu0 %v398
      %1301 = vmatprep.subr.mxu0 0.0
      %1302 = vmatpush2.msra.mxu0 %v391
      %1303 = vmatprep.subr.mxu0 0.0
      %1304 = vmatpush2.msra.mxu0 %v384
      %1305 = vmatprep.subr.mxu0 0.0
      %1306 = vmatpush2.msra.mxu0 %v377
      %1307 = vmatprep.subr.mxu0 0.0
      %1308 = vmatpush2.msra.mxu0 %v370
      %1309 = vmatprep.subr.mxu0 0.0
      %1310 = vmatpush2.msra.mxu0 %v363
      %1311 = vmatprep.mubr.f32.mxu0 %v180
      %1312 = vmatmul.mubr.f32.gmra.mxu0 %v179
      %v1313 = vpop.f32.mrf.mxu0
      %v1314 = vadd.f32 0.0, %v1313
      %v1315 = vpop.f32.mrf.mxu0
      %1316 = vmatprep.mubr.f32.mxu0 %v182
      %1317 = vmatmul.mubr.f32.gmra.mxu0 %v181
      %v1318 = vpop.f32.mrf.mxu0
      %v1319 = vadd.f32 0.0, %v1318
      %v1320 = vpop.f32.mrf.mxu0
      %1321 = vmatprep.mubr.f32.mxu0 %v184
      %1322 = vmatmul.mubr.f32.gmra.mxu0 %v183
      %v1323 = vpop.f32.mrf.mxu0
      %v1324 = vadd.f32 0.0, %v1323
      %v1325 = vpop.f32.mrf.mxu0
      %1326 = vmatprep.mubr.f32.mxu0 %v186
      %1327 = vmatmul.mubr.f32.gmra.mxu0 %v185
      %v1328 = vpop.f32.mrf.mxu0
      %v1329 = vadd.f32 0.0, %v1328
      %v1330 = vpop.f32.mrf.mxu0
      %1331 = vmatprep.mubr.f32.mxu0 %v188
      %1332 = vmatmul.mubr.f32.gmra.mxu0 %v187
      %v1333 = vpop.f32.mrf.mxu0
      %v1334 = vadd.f32 0.0, %v1333
      %v1335 = vpop.f32.mrf.mxu0
      %1336 = vmatprep.mubr.f32.mxu0 %v190
      %1337 = vmatmul.mubr.f32.gmra.mxu0 %v189
      %v1338 = vpop.f32.mrf.mxu0
      %v1339 = vadd.f32 0.0, %v1338
      %v1340 = vpop.f32.mrf.mxu0
      %1341 = vmatprep.mubr.f32.mxu0 %v192
      %1342 = vmatmul.mubr.f32.gmra.mxu0 %v191
      %v1343 = vpop.f32.mrf.mxu0
      %v1344 = vadd.f32 0.0, %v1343
      %v1345 = vpop.f32.mrf.mxu0
      %1346 = vmatprep.mubr.f32.mxu0 %v194
      %1347 = vmatmul.mubr.f32.gmra.mxu0 %v193
      %v1348 = vpop.f32.mrf.mxu0
      %v1349 = vadd.f32 0.0, %v1348
      %v1350 = vpop.f32.mrf.mxu0
      %1351 = vmatprep.mubr.f32.mxu0 %v196
      %1352 = vmatmul.mubr.f32.gmra.mxu0 %v195
      %v1353 = vpop.f32.mrf.mxu0
      %v1354 = vadd.f32 0.0, %v1353
      %v1355 = vpop.f32.mrf.mxu0
      %1356 = vmatprep.mubr.f32.mxu0 %v198
      %1357 = vmatmul.mubr.f32.gmra.mxu0 %v197
      %v1358 = vpop.f32.mrf.mxu0
      %v1359 = vadd.f32 0.0, %v1358
      %v1360 = vpop.f32.mrf.mxu0
      %1361 = vmatprep.mubr.f32.mxu0 %v200
      %1362 = vmatmul.mubr.f32.gmra.mxu0 %v199
      %v1363 = vpop.f32.mrf.mxu0
      %v1364 = vadd.f32 0.0, %v1363
      %v1365 = vpop.f32.mrf.mxu0
      %1366 = vmatprep.mubr.f32.mxu0 %v202
      %1367 = vmatmul.mubr.f32.gmra.mxu0 %v201
      %v1368 = vpop.f32.mrf.mxu0
      %v1369 = vadd.f32 0.0, %v1368
      %v1370 = vpop.f32.mrf.mxu0
      %1371 = vmatprep.mubr.f32.mxu0 %v204
      %1372 = vmatmul.mubr.f32.gmra.mxu0 %v203
      %v1373 = vpop.f32.mrf.mxu0
      %v1374 = vadd.f32 0.0, %v1373
      %v1375 = vpop.f32.mrf.mxu0
      %1376 = vmatprep.mubr.f32.mxu0 %v206
      %1377 = vmatmul.mubr.f32.gmra.mxu0 %v205
      %v1378 = vpop.f32.mrf.mxu0
      %v1379 = vadd.f32 0.0, %v1378
      %v1380 = vpop.f32.mrf.mxu0
      %1381 = vmatprep.mubr.f32.mxu0 %v208
      %1382 = vmatmul.mubr.f32.gmra.mxu0 %v207
      %v1383 = vpop.f32.mrf.mxu0
      %v1384 = vadd.f32 0.0, %v1383
      %v1385 = vpop.f32.mrf.mxu0
      %1386 = vmatprep.mubr.f32.mxu0 %v210
      %1387 = vmatmul.mubr.f32.gmra.mxu0 %v209
      %v1388 = vpop.f32.mrf.mxu0
      %v1389 = vadd.f32 0.0, %v1388
      %v1390 = vpop.f32.mrf.mxu0
      %1391 = vmatprep.mubr.f32.mxu0 %v212
      %1392 = vmatmul.mubr.f32.gmra.mxu0 %v211
      %v1393 = vpop.f32.mrf.mxu0
      %v1394 = vadd.f32 0.0, %v1393
      %v1395 = vpop.f32.mrf.mxu0
      %1396 = vmatprep.mubr.f32.mxu0 %v214
      %1397 = vmatmul.mubr.f32.gmra.mxu0 %v213
      %v1398 = vpop.f32.mrf.mxu0
      %v1399 = vadd.f32 0.0, %v1398
      %v1400 = vpop.f32.mrf.mxu0
      %1401 = vmatprep.mubr.f32.mxu0 %v216
      %1402 = vmatmul.mubr.f32.gmra.mxu0 %v215
      %v1403 = vpop.f32.mrf.mxu0
      %v1404 = vadd.f32 0.0, %v1403
      %v1405 = vpop.f32.mrf.mxu0
      %1406 = vmatprep.mubr.f32.mxu0 %v218
      %1407 = vmatmul.mubr.f32.gmra.mxu0 %v217
      %v1408 = vpop.f32.mrf.mxu0
      %v1409 = vadd.f32 0.0, %v1408
      %v1410 = vpop.f32.mrf.mxu0
      %1411 = vmatprep.mubr.f32.mxu0 %v220
      %1412 = vmatmul.mubr.f32.gmra.mxu0 %v219
      %v1413 = vpop.f32.mrf.mxu0
      %v1414 = vadd.f32 0.0, %v1413
      %v1415 = vpop.f32.mrf.mxu0
      %1416 = vmatprep.mubr.f32.mxu0 %v222
      %1417 = vmatmul.mubr.f32.gmra.mxu0 %v221
      %v1418 = vpop.f32.mrf.mxu0
      %v1419 = vadd.f32 0.0, %v1418
      %v1420 = vpop.f32.mrf.mxu0
      %1421 = vmatprep.mubr.f32.mxu0 %v224
      %1422 = vmatmul.mubr.f32.gmra.mxu0 %v223
      %v1423 = vpop.f32.mrf.mxu0
      %v1424 = vadd.f32 0.0, %v1423
      %v1425 = vpop.f32.mrf.mxu0
      %1426 = vmatprep.mubr.f32.mxu0 %v226
      %1427 = vmatmul.mubr.f32.gmra.mxu0 %v225
      %v1428 = vpop.f32.mrf.mxu0
      %v1429 = vadd.f32 0.0, %v1428
      %v1430 = vpop.f32.mrf.mxu0
      %1431 = vmatprep.mubr.f32.mxu0 %v228
      %1432 = vmatmul.mubr.f32.gmra.mxu0 %v227
      %v1433 = vpop.f32.mrf.mxu0
      %v1434 = vadd.f32 0.0, %v1433
      %v1435 = vpop.f32.mrf.mxu0
      %1436 = vmatprep.mubr.f32.mxu0 %v230
      %1437 = vmatmul.mubr.f32.gmra.mxu0 %v229
      %v1438 = vpop.f32.mrf.mxu0
      %v1439 = vadd.f32 0.0, %v1438
      %v1440 = vpop.f32.mrf.mxu0
      %1441 = vmatprep.mubr.f32.mxu0 %v232
      %1442 = vmatmul.mubr.f32.gmra.mxu0 %v231
      %v1443 = vpop.f32.mrf.mxu0
      %v1444 = vadd.f32 0.0, %v1443
      %v1445 = vpop.f32.mrf.mxu0
      %1446 = vmatprep.mubr.f32.mxu0 %v234
      %1447 = vmatmul.mubr.f32.gmra.mxu0 %v233
      %v1448 = vpop.f32.mrf.mxu0
      %v1449 = vadd.f32 0.0, %v1448
      %v1450 = vpop.f32.mrf.mxu0
      %1451 = vmatprep.mubr.f32.mxu0 %v236
      %1452 = vmatmul.mubr.f32.gmra.mxu0 %v235
      %v1453 = vpop.f32.mrf.mxu0
      %v1454 = vadd.f32 0.0, %v1453
      %v1455 = vpop.f32.mrf.mxu0
      %1456 = vmatprep.mubr.f32.mxu0 %v238
      %1457 = vmatmul.mubr.f32.gmra.mxu0 %v237
      %v1458 = vpop.f32.mrf.mxu0
      %v1459 = vadd.f32 0.0, %v1458
      %v1460 = vpop.f32.mrf.mxu0
      %1461 = vmatprep.mubr.f32.mxu0 %v240
      %1462 = vmatmul.mubr.f32.gmra.mxu0 %v239
      %v1463 = vpop.f32.mrf.mxu0
      %v1464 = vadd.f32 0.0, %v1463
      %v1465 = vpop.f32.mrf.mxu0
      %1466 = vmatprep.mubr.f32.mxu0 %v242
      %1467 = vmatmul.mubr.f32.gmra.mxu0 %v241
      %v1468 = vpop.f32.mrf.mxu0
      %v1469 = vadd.f32 0.0, %v1468
      %v1470 = vpop.f32.mrf.mxu0
      %1471 = vmatprep.mubr.f32.mxu0 %v244
      %1472 = vmatmul.mubr.f32.gmra.mxu0 %v243
      %v1473 = vpop.f32.mrf.mxu0
      %v1474 = vadd.f32 0.0, %v1473
      %v1475 = vpop.f32.mrf.mxu0
      %1476 = vdwg.mxu0
      %vm1510 = vcmask 1046528
      %v1511 = vrot.slane %v538, 1
      %v1512 = vrot.slane %v544, 1
      %v1513 = vsel %vm1510, %v1511, %v1512
      %v1514 = vrot.slane %v549, 1
      %v1515 = vsel %vm1510, %v1512, %v1514
      %v1516 = vrot.slane %v555, 1
      %v1517 = vrot.slane %v561, 1
      %v1518 = vsel %vm1510, %v1516, %v1517
      %v1519 = vrot.slane %v566, 1
      %v1520 = vsel %vm1510, %v1517, %v1519
      %v1521 = vrot.slane %v572, 1
      %v1522 = vrot.slane %v578, 1
      %v1523 = vsel %vm1510, %v1521, %v1522
      %v1524 = vrot.slane %v583, 1
      %v1525 = vsel %vm1510, %v1522, %v1524
      %v1526 = vrot.slane %v589, 1
      %v1527 = vrot.slane %v595, 1
      %v1528 = vsel %vm1510, %v1526, %v1527
      %v1529 = vrot.slane %v600, 1
      %v1530 = vsel %vm1510, %v1527, %v1529
      %v1531 = vrot.slane %v606, 1
      %v1532 = vrot.slane %v612, 1
      %v1533 = vsel %vm1510, %v1531, %v1532
      %v1534 = vrot.slane %v617, 1
      %v1535 = vsel %vm1510, %v1532, %v1534
      %v1536 = vrot.slane %v623, 1
      %v1537 = vrot.slane %v629, 1
      %v1538 = vsel %vm1510, %v1536, %v1537
      %v1539 = vrot.slane %v634, 1
      %v1540 = vsel %vm1510, %v1537, %v1539
      %v1541 = vrot.slane %v640, 1
      %v1542 = vrot.slane %v646, 1
      %v1543 = vsel %vm1510, %v1541, %v1542
      %v1544 = vrot.slane %v651, 1
      %v1545 = vsel %vm1510, %v1542, %v1544
      %v1546 = vrot.slane %v657, 1
      %v1547 = vrot.slane %v663, 1
      %v1548 = vsel %vm1510, %v1546, %v1547
      %v1549 = vrot.slane %v668, 1
      %v1550 = vsel %vm1510, %v1547, %v1549
      %v1551 = vrot.slane %v674, 1
      %v1552 = vrot.slane %v680, 1
      %v1553 = vsel %vm1510, %v1551, %v1552
      %v1554 = vrot.slane %v685, 1
      %v1555 = vsel %vm1510, %v1552, %v1554
      %v1556 = vrot.slane %v691, 1
      %v1557 = vrot.slane %v697, 1
      %v1558 = vsel %vm1510, %v1556, %v1557
      %v1559 = vrot.slane %v702, 1
      %v1560 = vsel %vm1510, %v1557, %v1559
      %v1561 = vrot.slane %v708, 1
      %v1562 = vrot.slane %v714, 1
      %v1563 = vsel %vm1510, %v1561, %v1562
      %v1564 = vrot.slane %v719, 1
      %v1565 = vsel %vm1510, %v1562, %v1564
      %v1588 = vadd.f32 %v536, %v1513
      %v1589 = vadd.f32 %v542, %v1515
      %v1590 = vadd.f32 %v553, %v1518
      %v1591 = vadd.f32 %v559, %v1520
      %v1592 = vadd.f32 %v570, %v1523
      %v1593 = vadd.f32 %v576, %v1525
      %v1594 = vadd.f32 %v587, %v1528
      %v1595 = vadd.f32 %v593, %v1530
      %v1596 = vadd.f32 %v604, %v1533
      %v1597 = vadd.f32 %v610, %v1535
      %v1598 = vadd.f32 %v621, %v1538
      %v1599 = vadd.f32 %v627, %v1540
      %v1600 = vadd.f32 %v638, %v1543
      %v1601 = vadd.f32 %v644, %v1545
      %v1602 = vadd.f32 %v655, %v1548
      %v1603 = vadd.f32 %v661, %v1550
      %v1604 = vadd.f32 %v672, %v1553
      %v1605 = vadd.f32 %v678, %v1555
      %v1606 = vadd.f32 %v689, %v1558
      %v1607 = vadd.f32 %v695, %v1560
      %v1608 = vadd.f32 %v706, %v1563
      %v1609 = vadd.f32 %v712, %v1565
      %vm1643 = vcmask 1045504
      %v1644 = vrot.slane %v788, 2
      %v1645 = vrot.slane %v794, 2
      %v1646 = vsel %vm1643, %v1644, %v1645
      %v1647 = vrot.slane %v800, 2
      %v1648 = vsel %vm1643, %v1645, %v1647
      %v1649 = vrot.slane %v806, 2
      %v1650 = vrot.slane %v812, 2
      %v1651 = vsel %vm1643, %v1649, %v1650
      %v1652 = vrot.slane %v818, 2
      %v1653 = vsel %vm1643, %v1650, %v1652
      %v1654 = vrot.slane %v824, 2
      %v1655 = vrot.slane %v830, 2
      %v1656 = vsel %vm1643, %v1654, %v1655
      %v1657 = vrot.slane %v836, 2
      %v1658 = vsel %vm1643, %v1655, %v1657
      %v1659 = vrot.slane %v842, 2
      %v1660 = vrot.slane %v848, 2
      %v1661 = vsel %vm1643, %v1659, %v1660
      %v1662 = vrot.slane %v854, 2
      %v1663 = vsel %vm1643, %v1660, %v1662
      %v1664 = vrot.slane %v860, 2
      %v1665 = vrot.slane %v866, 2
      %v1666 = vsel %vm1643, %v1664, %v1665
      %v1667 = vrot.slane %v872, 2
      %v1668 = vsel %vm1643, %v1665, %v1667
      %v1669 = vrot.slane %v878, 2
      %v1670 = vrot.slane %v884, 2
      %v1671 = vsel %vm1643, %v1669, %v1670
      %v1672 = vrot.slane %v890, 2
      %v1673 = vsel %vm1643, %v1670, %v1672
      %v1674 = vrot.slane %v896, 2
      %v1675 = vrot.slane %v902, 2
      %v1676 = vsel %vm1643, %v1674, %v1675
      %v1677 = vrot.slane %v908, 2
      %v1678 = vsel %vm1643, %v1675, %v1677
      %v1679 = vrot.slane %v914, 2
      %v1680 = vrot.slane %v920, 2
      %v1681 = vsel %vm1643, %v1679, %v1680
      %v1682 = vrot.slane %v926, 2
      %v1683 = vsel %vm1643, %v1680, %v1682
      %v1684 = vrot.slane %v932, 2
      %v1685 = vrot.slane %v938, 2
      %v1686 = vsel %vm1643, %v1684, %v1685
      %v1687 = vrot.slane %v944, 2
      %v1688 = vsel %vm1643, %v1685, %v1687
      %v1689 = vrot.slane %v950, 2
      %v1690 = vrot.slane %v956, 2
      %v1691 = vsel %vm1643, %v1689, %v1690
      %v1692 = vrot.slane %v962, 2
      %v1693 = vsel %vm1643, %v1690, %v1692
      %v1694 = vrot.slane %v968, 2
      %v1695 = vrot.slane %v974, 2
      %v1696 = vsel %vm1643, %v1694, %v1695
      %v1697 = vrot.slane %v980, 2
      %v1698 = vsel %vm1643, %v1695, %v1697
      %v1721 = vadd.f32 %v1588, %v1646
      %v1722 = vadd.f32 %v1589, %v1648
      %v1723 = vadd.f32 %v1590, %v1651
      %v1724 = vadd.f32 %v1591, %v1653
      %v1725 = vadd.f32 %v1592, %v1656
      %v1726 = vadd.f32 %v1593, %v1658
      %v1727 = vadd.f32 %v1594, %v1661
      %v1728 = vadd.f32 %v1595, %v1663
      %v1729 = vadd.f32 %v1596, %v1666
      %v1730 = vadd.f32 %v1597, %v1668
      %v1731 = vadd.f32 %v1598, %v1671
      %v1732 = vadd.f32 %v1599, %v1673
      %v1733 = vadd.f32 %v1600, %v1676
      %v1734 = vadd.f32 %v1601, %v1678
      %v1735 = vadd.f32 %v1602, %v1681
      %v1736 = vadd.f32 %v1603, %v1683
      %v1737 = vadd.f32 %v1604, %v1686
      %v1738 = vadd.f32 %v1605, %v1688
      %v1739 = vadd.f32 %v1606, %v1691
      %v1740 = vadd.f32 %v1607, %v1693
      %v1741 = vadd.f32 %v1608, %v1696
      %v1742 = vadd.f32 %v1609, %v1698
      %vm1776 = vcmask 1044480
      %v1777 = vrot.slane %v790, 3
      %v1778 = vrot.slane %v796, 3
      %v1779 = vsel %vm1776, %v1777, %v1778
      %v1780 = vrot.slane %v802, 3
      %v1781 = vsel %vm1776, %v1778, %v1780
      %v1782 = vrot.slane %v808, 3
      %v1783 = vrot.slane %v814, 3
      %v1784 = vsel %vm1776, %v1782, %v1783
      %v1785 = vrot.slane %v820, 3
      %v1786 = vsel %vm1776, %v1783, %v1785
      %v1787 = vrot.slane %v826, 3
      %v1788 = vrot.slane %v832, 3
      %v1789 = vsel %vm1776, %v1787, %v1788
      %v1790 = vrot.slane %v838, 3
      %v1791 = vsel %vm1776, %v1788, %v1790
      %v1792 = vrot.slane %v844, 3
      %v1793 = vrot.slane %v850, 3
      %v1794 = vsel %vm1776, %v1792, %v1793
      %v1795 = vrot.slane %v856, 3
      %v1796 = vsel %vm1776, %v1793, %v1795
      %v1797 = vrot.slane %v862, 3
      %v1798 = vrot.slane %v868, 3
      %v1799 = vsel %vm1776, %v1797, %v1798
      %v1800 = vrot.slane %v874, 3
      %v1801 = vsel %vm1776, %v1798, %v1800
      %v1802 = vrot.slane %v880, 3
      %v1803 = vrot.slane %v886, 3
      %v1804 = vsel %vm1776, %v1802, %v1803
      %v1805 = vrot.slane %v892, 3
      %v1806 = vsel %vm1776, %v1803, %v1805
      %v1807 = vrot.slane %v898, 3
      %v1808 = vrot.slane %v904, 3
      %v1809 = vsel %vm1776, %v1807, %v1808
      %v1810 = vrot.slane %v910, 3
      %v1811 = vsel %vm1776, %v1808, %v1810
      %v1812 = vrot.slane %v916, 3
      %v1813 = vrot.slane %v922, 3
      %v1814 = vsel %vm1776, %v1812, %v1813
      %v1815 = vrot.slane %v928, 3
      %v1816 = vsel %vm1776, %v1813, %v1815
      %v1817 = vrot.slane %v934, 3
      %v1818 = vrot.slane %v940, 3
      %v1819 = vsel %vm1776, %v1817, %v1818
      %v1820 = vrot.slane %v946, 3
      %v1821 = vsel %vm1776, %v1818, %v1820
      %v1822 = vrot.slane %v952, 3
      %v1823 = vrot.slane %v958, 3
      %v1824 = vsel %vm1776, %v1822, %v1823
      %v1825 = vrot.slane %v964, 3
      %v1826 = vsel %vm1776, %v1823, %v1825
      %v1827 = vrot.slane %v970, 3
      %v1828 = vrot.slane %v976, 3
      %v1829 = vsel %vm1776, %v1827, %v1828
      %v1830 = vrot.slane %v982, 3
      %v1831 = vsel %vm1776, %v1828, %v1830
      %v1854 = vadd.f32 %v1721, %v1779
      %v1855 = vadd.f32 %v1722, %v1781
      %v1856 = vadd.f32 %v1723, %v1784
      %v1857 = vadd.f32 %v1724, %v1786
      %v1858 = vadd.f32 %v1725, %v1789
      %v1859 = vadd.f32 %v1726, %v1791
      %v1860 = vadd.f32 %v1727, %v1794
      %v1861 = vadd.f32 %v1728, %v1796
      %v1862 = vadd.f32 %v1729, %v1799
      %v1863 = vadd.f32 %v1730, %v1801
      %v1864 = vadd.f32 %v1731, %v1804
      %v1865 = vadd.f32 %v1732, %v1806
      %v1866 = vadd.f32 %v1733, %v1809
      %v1867 = vadd.f32 %v1734, %v1811
      %v1868 = vadd.f32 %v1735, %v1814
      %v1869 = vadd.f32 %v1736, %v1816
      %v1870 = vadd.f32 %v1737, %v1819
      %v1871 = vadd.f32 %v1738, %v1821
      %v1872 = vadd.f32 %v1739, %v1824
      %v1873 = vadd.f32 %v1740, %v1826
      %v1874 = vadd.f32 %v1741, %v1829
      %v1875 = vadd.f32 %v1742, %v1831
      %vm1909 = vcmask 1043456
      %v1910 = vrot.slane %v1051, 4
      %v1911 = vrot.slane %v1057, 4
      %v1912 = vsel %vm1909, %v1910, %v1911
      %v1913 = vrot.slane %v1063, 4
      %v1914 = vsel %vm1909, %v1911, %v1913
      %v1915 = vrot.slane %v1069, 4
      %v1916 = vrot.slane %v1075, 4
      %v1917 = vsel %vm1909, %v1915, %v1916
      %v1918 = vrot.slane %v1081, 4
      %v1919 = vsel %vm1909, %v1916, %v1918
      %v1920 = vrot.slane %v1087, 4
      %v1921 = vrot.slane %v1093, 4
      %v1922 = vsel %vm1909, %v1920, %v1921
      %v1923 = vrot.slane %v1099, 4
      %v1924 = vsel %vm1909, %v1921, %v1923
      %v1925 = vrot.slane %v1105, 4
      %v1926 = vrot.slane %v1111, 4
      %v1927 = vsel %vm1909, %v1925, %v1926
      %v1928 = vrot.slane %v1117, 4
      %v1929 = vsel %vm1909, %v1926, %v1928
      %v1930 = vrot.slane %v1123, 4
      %v1931 = vrot.slane %v1129, 4
      %v1932 = vsel %vm1909, %v1930, %v1931
      %v1933 = vrot.slane %v1135, 4
      %v1934 = vsel %vm1909, %v1931, %v1933
      %v1935 = vrot.slane %v1141, 4
      %v1936 = vrot.slane %v1147, 4
      %v1937 = vsel %vm1909, %v1935, %v1936
      %v1938 = vrot.slane %v1153, 4
      %v1939 = vsel %vm1909, %v1936, %v1938
      %v1940 = vrot.slane %v1159, 4
      %v1941 = vrot.slane %v1165, 4
      %v1942 = vsel %vm1909, %v1940, %v1941
      %v1943 = vrot.slane %v1171, 4
      %v1944 = vsel %vm1909, %v1941, %v1943
      %v1945 = vrot.slane %v1177, 4
      %v1946 = vrot.slane %v1183, 4
      %v1947 = vsel %vm1909, %v1945, %v1946
      %v1948 = vrot.slane %v1189, 4
      %v1949 = vsel %vm1909, %v1946, %v1948
      %v1950 = vrot.slane %v1195, 4
      %v1951 = vrot.slane %v1201, 4
      %v1952 = vsel %vm1909, %v1950, %v1951
      %v1953 = vrot.slane %v1207, 4
      %v1954 = vsel %vm1909, %v1951, %v1953
      %v1955 = vrot.slane %v1213, 4
      %v1956 = vrot.slane %v1219, 4
      %v1957 = vsel %vm1909, %v1955, %v1956
      %v1958 = vrot.slane %v1225, 4
      %v1959 = vsel %vm1909, %v1956, %v1958
      %v1960 = vrot.slane %v1231, 4
      %v1961 = vrot.slane %v1237, 4
      %v1962 = vsel %vm1909, %v1960, %v1961
      %v1963 = vrot.slane %v1243, 4
      %v1964 = vsel %vm1909, %v1961, %v1963
      %v1987 = vadd.f32 %v1854, %v1912
      %v1988 = vadd.f32 %v1855, %v1914
      %v1989 = vadd.f32 %v1856, %v1917
      %v1990 = vadd.f32 %v1857, %v1919
      %v1991 = vadd.f32 %v1858, %v1922
      %v1992 = vadd.f32 %v1859, %v1924
      %v1993 = vadd.f32 %v1860, %v1927
      %v1994 = vadd.f32 %v1861, %v1929
      %v1995 = vadd.f32 %v1862, %v1932
      %v1996 = vadd.f32 %v1863, %v1934
      %v1997 = vadd.f32 %v1864, %v1937
      %v1998 = vadd.f32 %v1865, %v1939
      %v1999 = vadd.f32 %v1866, %v1942
      %v2000 = vadd.f32 %v1867, %v1944
      %v2001 = vadd.f32 %v1868, %v1947
      %v2002 = vadd.f32 %v1869, %v1949
      %v2003 = vadd.f32 %v1870, %v1952
      %v2004 = vadd.f32 %v1871, %v1954
      %v2005 = vadd.f32 %v1872, %v1957
      %v2006 = vadd.f32 %v1873, %v1959
      %v2007 = vadd.f32 %v1874, %v1962
      %v2008 = vadd.f32 %v1875, %v1964
      %vm2042 = vcmask 1042432
      %v2043 = vrot.slane %v1053, 5
      %v2044 = vrot.slane %v1059, 5
      %v2045 = vsel %vm2042, %v2043, %v2044
      %v2046 = vrot.slane %v1065, 5
      %v2047 = vsel %vm2042, %v2044, %v2046
      %v2048 = vrot.slane %v1071, 5
      %v2049 = vrot.slane %v1077, 5
      %v2050 = vsel %vm2042, %v2048, %v2049
      %v2051 = vrot.slane %v1083, 5
      %v2052 = vsel %vm2042, %v2049, %v2051
      %v2053 = vrot.slane %v1089, 5
      %v2054 = vrot.slane %v1095, 5
      %v2055 = vsel %vm2042, %v2053, %v2054
      %v2056 = vrot.slane %v1101, 5
      %v2057 = vsel %vm2042, %v2054, %v2056
      %v2058 = vrot.slane %v1107, 5
      %v2059 = vrot.slane %v1113, 5
      %v2060 = vsel %vm2042, %v2058, %v2059
      %v2061 = vrot.slane %v1119, 5
      %v2062 = vsel %vm2042, %v2059, %v2061
      %v2063 = vrot.slane %v1125, 5
      %v2064 = vrot.slane %v1131, 5
      %v2065 = vsel %vm2042, %v2063, %v2064
      %v2066 = vrot.slane %v1137, 5
      %v2067 = vsel %vm2042, %v2064, %v2066
      %v2068 = vrot.slane %v1143, 5
      %v2069 = vrot.slane %v1149, 5
      %v2070 = vsel %vm2042, %v2068, %v2069
      %v2071 = vrot.slane %v1155, 5
      %v2072 = vsel %vm2042, %v2069, %v2071
      %v2073 = vrot.slane %v1161, 5
      %v2074 = vrot.slane %v1167, 5
      %v2075 = vsel %vm2042, %v2073, %v2074
      %v2076 = vrot.slane %v1173, 5
      %v2077 = vsel %vm2042, %v2074, %v2076
      %v2078 = vrot.slane %v1179, 5
      %v2079 = vrot.slane %v1185, 5
      %v2080 = vsel %vm2042, %v2078, %v2079
      %v2081 = vrot.slane %v1191, 5
      %v2082 = vsel %vm2042, %v2079, %v2081
      %v2083 = vrot.slane %v1197, 5
      %v2084 = vrot.slane %v1203, 5
      %v2085 = vsel %vm2042, %v2083, %v2084
      %v2086 = vrot.slane %v1209, 5
      %v2087 = vsel %vm2042, %v2084, %v2086
      %v2088 = vrot.slane %v1215, 5
      %v2089 = vrot.slane %v1221, 5
      %v2090 = vsel %vm2042, %v2088, %v2089
      %v2091 = vrot.slane %v1227, 5
      %v2092 = vsel %vm2042, %v2089, %v2091
      %v2093 = vrot.slane %v1233, 5
      %v2094 = vrot.slane %v1239, 5
      %v2095 = vsel %vm2042, %v2093, %v2094
      %v2096 = vrot.slane %v1245, 5
      %v2097 = vsel %vm2042, %v2094, %v2096
      %v2120 = vadd.f32 %v1987, %v2045
      %v2121 = vadd.f32 %v1988, %v2047
      %v2122 = vadd.f32 %v1989, %v2050
      %v2123 = vadd.f32 %v1990, %v2052
      %v2124 = vadd.f32 %v1991, %v2055
      %v2125 = vadd.f32 %v1992, %v2057
      %v2126 = vadd.f32 %v1993, %v2060
      %v2127 = vadd.f32 %v1994, %v2062
      %v2128 = vadd.f32 %v1995, %v2065
      %v2129 = vadd.f32 %v1996, %v2067
      %v2130 = vadd.f32 %v1997, %v2070
      %v2131 = vadd.f32 %v1998, %v2072
      %v2132 = vadd.f32 %v1999, %v2075
      %v2133 = vadd.f32 %v2000, %v2077
      %v2134 = vadd.f32 %v2001, %v2080
      %v2135 = vadd.f32 %v2002, %v2082
      %v2136 = vadd.f32 %v2003, %v2085
      %v2137 = vadd.f32 %v2004, %v2087
      %v2138 = vadd.f32 %v2005, %v2090
      %v2139 = vadd.f32 %v2006, %v2092
      %v2140 = vadd.f32 %v2007, %v2095
      %v2141 = vadd.f32 %v2008, %v2097
      %vm2175 = vcmask 1041408
      %v2176 = vrot.slane %v1314, 6
      %v2177 = vrot.slane %v1319, 6
      %v2178 = vsel %vm2175, %v2176, %v2177
      %v2179 = vrot.slane %v1324, 6
      %v2180 = vsel %vm2175, %v2177, %v2179
      %v2181 = vrot.slane %v1329, 6
      %v2182 = vrot.slane %v1334, 6
      %v2183 = vsel %vm2175, %v2181, %v2182
      %v2184 = vrot.slane %v1339, 6
      %v2185 = vsel %vm2175, %v2182, %v2184
      %v2186 = vrot.slane %v1344, 6
      %v2187 = vrot.slane %v1349, 6
      %v2188 = vsel %vm2175, %v2186, %v2187
      %v2189 = vrot.slane %v1354, 6
      %v2190 = vsel %vm2175, %v2187, %v2189
      %v2191 = vrot.slane %v1359, 6
      %v2192 = vrot.slane %v1364, 6
      %v2193 = vsel %vm2175, %v2191, %v2192
      %v2194 = vrot.slane %v1369, 6
      %v2195 = vsel %vm2175, %v2192, %v2194
      %v2196 = vrot.slane %v1374, 6
      %v2197 = vrot.slane %v1379, 6
      %v2198 = vsel %vm2175, %v2196, %v2197
      %v2199 = vrot.slane %v1384, 6
      %v2200 = vsel %vm2175, %v2197, %v2199
      %v2201 = vrot.slane %v1389, 6
      %v2202 = vrot.slane %v1394, 6
      %v2203 = vsel %vm2175, %v2201, %v2202
      %v2204 = vrot.slane %v1399, 6
      %v2205 = vsel %vm2175, %v2202, %v2204
      %v2206 = vrot.slane %v1404, 6
      %v2207 = vrot.slane %v1409, 6
      %v2208 = vsel %vm2175, %v2206, %v2207
      %v2209 = vrot.slane %v1414, 6
      %v2210 = vsel %vm2175, %v2207, %v2209
      %v2211 = vrot.slane %v1419, 6
      %v2212 = vrot.slane %v1424, 6
      %v2213 = vsel %vm2175, %v2211, %v2212
      %v2214 = vrot.slane %v1429, 6
      %v2215 = vsel %vm2175, %v2212, %v2214
      %v2216 = vrot.slane %v1434, 6
      %v2217 = vrot.slane %v1439, 6
      %v2218 = vsel %vm2175, %v2216, %v2217
      %v2219 = vrot.slane %v1444, 6
      %v2220 = vsel %vm2175, %v2217, %v2219
      %v2221 = vrot.slane %v1449, 6
      %v2222 = vrot.slane %v1454, 6
      %v2223 = vsel %vm2175, %v2221, %v2222
      %v2224 = vrot.slane %v1459, 6
      %v2225 = vsel %vm2175, %v2222, %v2224
      %v2226 = vrot.slane %v1464, 6
      %v2227 = vrot.slane %v1469, 6
      %v2228 = vsel %vm2175, %v2226, %v2227
      %v2229 = vrot.slane %v1474, 6
      %v2230 = vsel %vm2175, %v2227, %v2229
      %v2253 = vadd.f32 %v2120, %v2178
      %v2254 = vadd.f32 %v2121, %v2180
      %v2255 = vadd.f32 %v2122, %v2183
      %v2256 = vadd.f32 %v2123, %v2185
      %v2257 = vadd.f32 %v2124, %v2188
      %v2258 = vadd.f32 %v2125, %v2190
      %v2259 = vadd.f32 %v2126, %v2193
      %v2260 = vadd.f32 %v2127, %v2195
      %v2261 = vadd.f32 %v2128, %v2198
      %v2262 = vadd.f32 %v2129, %v2200
      %v2263 = vadd.f32 %v2130, %v2203
      %v2264 = vadd.f32 %v2131, %v2205
      %v2265 = vadd.f32 %v2132, %v2208
      %v2266 = vadd.f32 %v2133, %v2210
      %v2267 = vadd.f32 %v2134, %v2213
      %v2268 = vadd.f32 %v2135, %v2215
      %v2269 = vadd.f32 %v2136, %v2218
      %v2270 = vadd.f32 %v2137, %v2220
      %v2271 = vadd.f32 %v2138, %v2223
      %v2272 = vadd.f32 %v2139, %v2225
      %v2273 = vadd.f32 %v2140, %v2228
      %v2274 = vadd.f32 %v2141, %v2230
      %v2275 = vld [vmem:[%s2] sm:$0x1]
      %v2277 = vlaneseq
      %v2278 = vshrl.u32 %v2277, 7
      %v2279 = vsub.s32 0, %v2278
      %v2280 = vrot.slane %v2275, %v2279
      %v2282 = vadd.f32 %v2253, %v2280
      %v2283 = vadd.f32 %v2254, %v2280
      %v2284 = vadd.f32 %v2255, %v2280
      %v2285 = vadd.f32 %v2256, %v2280
      %v2286 = vadd.f32 %v2257, %v2280
      %v2287 = vadd.f32 %v2258, %v2280
      %v2288 = vadd.f32 %v2259, %v2280
      %v2289 = vadd.f32 %v2260, %v2280
      %v2290 = vadd.f32 %v2261, %v2280
      %v2291 = vadd.f32 %v2262, %v2280
      %v2292 = vadd.f32 %v2263, %v2280
      %v2293 = vadd.f32 %v2264, %v2280
      %v2294 = vadd.f32 %v2265, %v2280
      %v2295 = vadd.f32 %v2266, %v2280
      %v2296 = vadd.f32 %v2267, %v2280
      %v2297 = vadd.f32 %v2268, %v2280
      %v2298 = vadd.f32 %v2269, %v2280
      %v2299 = vadd.f32 %v2270, %v2280
      %v2300 = vadd.f32 %v2271, %v2280
      %v2301 = vadd.f32 %v2272, %v2280
      %v2302 = vadd.f32 %v2273, %v2280
      %v2303 = vadd.f32 %v2274, %v2280
      %2326 = vrot.lane.b32.xlu0 %v2282, 118
      %v2327 = vpop.permute.xlu0 %2326
      %2328 = vrot.lane.b32.xlu0 %v2283, 118
      %v2329 = vpop.permute.xlu0 %2328
      %2330 = vrot.lane.b32.xlu0 %v2284, 118
      %v2331 = vpop.permute.xlu0 %2330
      %2332 = vrot.lane.b32.xlu0 %v2285, 118
      %v2333 = vpop.permute.xlu0 %2332
      %2334 = vrot.lane.b32.xlu0 %v2286, 118
      %v2335 = vpop.permute.xlu0 %2334
      %2336 = vrot.lane.b32.xlu0 %v2287, 118
      %v2337 = vpop.permute.xlu0 %2336
      %2338 = vrot.lane.b32.xlu0 %v2288, 118
      %v2339 = vpop.permute.xlu0 %2338
      %2340 = vrot.lane.b32.xlu0 %v2289, 118
      %v2341 = vpop.permute.xlu0 %2340
      %2342 = vrot.lane.b32.xlu0 %v2290, 118
      %v2343 = vpop.permute.xlu0 %2342
      %2344 = vrot.lane.b32.xlu0 %v2291, 118
      %v2345 = vpop.permute.xlu0 %2344
      %2346 = vrot.lane.b32.xlu0 %v2292, 118
      %v2347 = vpop.permute.xlu0 %2346
      %2348 = vrot.lane.b32.xlu0 %v2293, 118
      %v2349 = vpop.permute.xlu0 %2348
      %2350 = vrot.lane.b32.xlu0 %v2294, 118
      %v2351 = vpop.permute.xlu0 %2350
      %2352 = vrot.lane.b32.xlu0 %v2295, 118
      %v2353 = vpop.permute.xlu0 %2352
      %2354 = vrot.lane.b32.xlu0 %v2296, 118
      %v2355 = vpop.permute.xlu0 %2354
      %2356 = vrot.lane.b32.xlu0 %v2297, 118
      %v2357 = vpop.permute.xlu0 %2356
      %2358 = vrot.lane.b32.xlu0 %v2298, 118
      %v2359 = vpop.permute.xlu0 %2358
      %2360 = vrot.lane.b32.xlu0 %v2299, 118
      %v2361 = vpop.permute.xlu0 %2360
      %2362 = vrot.lane.b32.xlu0 %v2300, 118
      %v2363 = vpop.permute.xlu0 %2362
      %2364 = vrot.lane.b32.xlu0 %v2301, 118
      %v2365 = vpop.permute.xlu0 %2364
      %2366 = vrot.lane.b32.xlu0 %v2302, 118
      %v2367 = vpop.permute.xlu0 %2366
      %2368 = vrot.lane.b32.xlu0 %v2303, 118
      %v2369 = vpop.permute.xlu0 %2368
      %v2392 = vmax.f32 %v2282, %v2327
      %v2393 = vmax.f32 %v2283, %v2329
      %v2394 = vmax.f32 %v2284, %v2331
      %v2395 = vmax.f32 %v2285, %v2333
      %v2396 = vmax.f32 %v2286, %v2335
      %v2397 = vmax.f32 %v2287, %v2337
      %v2398 = vmax.f32 %v2288, %v2339
      %v2399 = vmax.f32 %v2289, %v2341
      %v2400 = vmax.f32 %v2290, %v2343
      %v2401 = vmax.f32 %v2291, %v2345
      %v2402 = vmax.f32 %v2292, %v2347
      %v2403 = vmax.f32 %v2293, %v2349
      %v2404 = vmax.f32 %v2294, %v2351
      %v2405 = vmax.f32 %v2295, %v2353
      %v2406 = vmax.f32 %v2296, %v2355
      %v2407 = vmax.f32 %v2297, %v2357
      %v2408 = vmax.f32 %v2298, %v2359
      %v2409 = vmax.f32 %v2299, %v2361
      %v2410 = vmax.f32 %v2300, %v2363
      %v2411 = vmax.f32 %v2301, %v2365
      %v2412 = vmax.f32 %v2302, %v2367
      %v2413 = vmax.f32 %v2303, %v2369
      %2414 = vrot.lane.b32.xlu0 %v2282, 108
      %v2415 = vpop.permute.xlu0 %2414
      %2416 = vrot.lane.b32.xlu0 %v2283, 108
      %v2417 = vpop.permute.xlu0 %2416
      %2418 = vrot.lane.b32.xlu0 %v2284, 108
      %v2419 = vpop.permute.xlu0 %2418
      %2420 = vrot.lane.b32.xlu0 %v2285, 108
      %v2421 = vpop.permute.xlu0 %2420
      %2422 = vrot.lane.b32.xlu0 %v2286, 108
      %v2423 = vpop.permute.xlu0 %2422
      %2424 = vrot.lane.b32.xlu0 %v2287, 108
      %v2425 = vpop.permute.xlu0 %2424
      %2426 = vrot.lane.b32.xlu0 %v2288, 108
      %v2427 = vpop.permute.xlu0 %2426
      %2428 = vrot.lane.b32.xlu0 %v2289, 108
      %v2429 = vpop.permute.xlu0 %2428
      %2430 = vrot.lane.b32.xlu0 %v2290, 108
      %v2431 = vpop.permute.xlu0 %2430
      %2432 = vrot.lane.b32.xlu0 %v2291, 108
      %v2433 = vpop.permute.xlu0 %2432
      %2434 = vrot.lane.b32.xlu0 %v2292, 108
      %v2435 = vpop.permute.xlu0 %2434
      %2436 = vrot.lane.b32.xlu0 %v2293, 108
      %v2437 = vpop.permute.xlu0 %2436
      %2438 = vrot.lane.b32.xlu0 %v2294, 108
      %v2439 = vpop.permute.xlu0 %2438
      %2440 = vrot.lane.b32.xlu0 %v2295, 108
      %v2441 = vpop.permute.xlu0 %2440
      %2442 = vrot.lane.b32.xlu0 %v2296, 108
      %v2443 = vpop.permute.xlu0 %2442
      %2444 = vrot.lane.b32.xlu0 %v2297, 108
      %v2445 = vpop.permute.xlu0 %2444
      %2446 = vrot.lane.b32.xlu0 %v2298, 108
      %v2447 = vpop.permute.xlu0 %2446
      %2448 = vrot.lane.b32.xlu0 %v2299, 108
      %v2449 = vpop.permute.xlu0 %2448
      %2450 = vrot.lane.b32.xlu0 %v2300, 108
      %v2451 = vpop.permute.xlu0 %2450
      %2452 = vrot.lane.b32.xlu0 %v2301, 108
      %v2453 = vpop.permute.xlu0 %2452
      %2454 = vrot.lane.b32.xlu0 %v2302, 108
      %v2455 = vpop.permute.xlu0 %2454
      %2456 = vrot.lane.b32.xlu0 %v2303, 108
      %v2457 = vpop.permute.xlu0 %2456
      %v2480 = vmax.f32 %v2392, %v2415
      %v2481 = vmax.f32 %v2393, %v2417
      %v2482 = vmax.f32 %v2394, %v2419
      %v2483 = vmax.f32 %v2395, %v2421
      %v2484 = vmax.f32 %v2396, %v2423
      %v2485 = vmax.f32 %v2397, %v2425
      %v2486 = vmax.f32 %v2398, %v2427
      %v2487 = vmax.f32 %v2399, %v2429
      %v2488 = vmax.f32 %v2400, %v2431
      %v2489 = vmax.f32 %v2401, %v2433
      %v2490 = vmax.f32 %v2402, %v2435
      %v2491 = vmax.f32 %v2403, %v2437
      %v2492 = vmax.f32 %v2404, %v2439
      %v2493 = vmax.f32 %v2405, %v2441
      %v2494 = vmax.f32 %v2406, %v2443
      %v2495 = vmax.f32 %v2407, %v2445
      %v2496 = vmax.f32 %v2408, %v2447
      %v2497 = vmax.f32 %v2409, %v2449
      %v2498 = vmax.f32 %v2410, %v2451
      %v2499 = vmax.f32 %v2411, %v2453
      %v2500 = vmax.f32 %v2412, %v2455
      %v2501 = vmax.f32 %v2413, %v2457
      %v2502 = vrot.slane %v2282, 1
      %v2503 = vrot.slane %v2283, 1
      %v2504 = vsel %vm1510, %v2502, %v2503
      %v2505 = vrot.slane %v2284, 1
      %v2506 = vrot.slane %v2285, 1
      %v2507 = vsel %vm1510, %v2505, %v2506
      %v2508 = vrot.slane %v2286, 1
      %v2509 = vrot.slane %v2287, 1
      %v2510 = vsel %vm1510, %v2508, %v2509
      %v2511 = vrot.slane %v2288, 1
      %v2512 = vrot.slane %v2289, 1
      %v2513 = vsel %vm1510, %v2511, %v2512
      %v2514 = vrot.slane %v2290, 1
      %v2515 = vrot.slane %v2291, 1
      %v2516 = vsel %vm1510, %v2514, %v2515
      %v2517 = vrot.slane %v2292, 1
      %v2518 = vrot.slane %v2293, 1
      %v2519 = vsel %vm1510, %v2517, %v2518
      %v2520 = vrot.slane %v2294, 1
      %v2521 = vrot.slane %v2295, 1
      %v2522 = vsel %vm1510, %v2520, %v2521
      %v2523 = vrot.slane %v2296, 1
      %v2524 = vrot.slane %v2297, 1
      %v2525 = vsel %vm1510, %v2523, %v2524
      %v2526 = vrot.slane %v2298, 1
      %v2527 = vrot.slane %v2299, 1
      %v2528 = vsel %vm1510, %v2526, %v2527
      %v2529 = vrot.slane %v2300, 1
      %v2530 = vrot.slane %v2301, 1
      %v2531 = vsel %vm1510, %v2529, %v2530
      %v2532 = vrot.slane %v2302, 1
      %v2533 = vrot.slane %v2303, 1
      %v2534 = vsel %vm1510, %v2532, %v2533
      %v2557 = vmax.f32 %v2480, %v2504
      %v2558 = vmax.f32 %v2481, %v2503
      %v2559 = vmax.f32 %v2482, %v2507
      %v2560 = vmax.f32 %v2483, %v2506
      %v2561 = vmax.f32 %v2484, %v2510
      %v2562 = vmax.f32 %v2485, %v2509
      %v2563 = vmax.f32 %v2486, %v2513
      %v2564 = vmax.f32 %v2487, %v2512
      %v2565 = vmax.f32 %v2488, %v2516
      %v2566 = vmax.f32 %v2489, %v2515
      %v2567 = vmax.f32 %v2490, %v2519
      %v2568 = vmax.f32 %v2491, %v2518
      %v2569 = vmax.f32 %v2492, %v2522
      %v2570 = vmax.f32 %v2493, %v2521
      %v2571 = vmax.f32 %v2494, %v2525
      %v2572 = vmax.f32 %v2495, %v2524
      %v2573 = vmax.f32 %v2496, %v2528
      %v2574 = vmax.f32 %v2497, %v2527
      %v2575 = vmax.f32 %v2498, %v2531
      %v2576 = vmax.f32 %v2499, %v2530
      %v2577 = vmax.f32 %v2500, %v2534
      %v2578 = vmax.f32 %v2501, %v2533
      %2579 = vrot.lane.b32.xlu0 %v2504, 118
      %v2580 = vpop.permute.xlu0 %2579
      %2581 = vrot.lane.b32.xlu0 %v2503, 118
      %v2582 = vpop.permute.xlu0 %2581
      %2583 = vrot.lane.b32.xlu0 %v2507, 118
      %v2584 = vpop.permute.xlu0 %2583
      %2585 = vrot.lane.b32.xlu0 %v2506, 118
      %v2586 = vpop.permute.xlu0 %2585
      %2587 = vrot.lane.b32.xlu0 %v2510, 118
      %v2588 = vpop.permute.xlu0 %2587
      %2589 = vrot.lane.b32.xlu0 %v2509, 118
      %v2590 = vpop.permute.xlu0 %2589
      %2591 = vrot.lane.b32.xlu0 %v2513, 118
      %v2592 = vpop.permute.xlu0 %2591
      %2593 = vrot.lane.b32.xlu0 %v2512, 118
      %v2594 = vpop.permute.xlu0 %2593
      %2595 = vrot.lane.b32.xlu0 %v2516, 118
      %v2596 = vpop.permute.xlu0 %2595
      %2597 = vrot.lane.b32.xlu0 %v2515, 118
      %v2598 = vpop.permute.xlu0 %2597
      %2599 = vrot.lane.b32.xlu0 %v2519, 118
      %v2600 = vpop.permute.xlu0 %2599
      %2601 = vrot.lane.b32.xlu0 %v2518, 118
      %v2602 = vpop.permute.xlu0 %2601
      %2603 = vrot.lane.b32.xlu0 %v2522, 118
      %v2604 = vpop.permute.xlu0 %2603
      %2605 = vrot.lane.b32.xlu0 %v2521, 118
      %v2606 = vpop.permute.xlu0 %2605
      %2607 = vrot.lane.b32.xlu0 %v2525, 118
      %v2608 = vpop.permute.xlu0 %2607
      %2609 = vrot.lane.b32.xlu0 %v2524, 118
      %v2610 = vpop.permute.xlu0 %2609
      %2611 = vrot.lane.b32.xlu0 %v2528, 118
      %v2612 = vpop.permute.xlu0 %2611
      %2613 = vrot.lane.b32.xlu0 %v2527, 118
      %v2614 = vpop.permute.xlu0 %2613
      %2615 = vrot.lane.b32.xlu0 %v2531, 118
      %v2616 = vpop.permute.xlu0 %2615
      %2617 = vrot.lane.b32.xlu0 %v2530, 118
      %v2618 = vpop.permute.xlu0 %2617
      %2619 = vrot.lane.b32.xlu0 %v2534, 118
      %v2620 = vpop.permute.xlu0 %2619
      %2621 = vrot.lane.b32.xlu0 %v2533, 118
      %v2622 = vpop.permute.xlu0 %2621
      %v2645 = vmax.f32 %v2557, %v2580
      %v2646 = vmax.f32 %v2558, %v2582
      %v2647 = vmax.f32 %v2559, %v2584
      %v2648 = vmax.f32 %v2560, %v2586
      %v2649 = vmax.f32 %v2561, %v2588
      %v2650 = vmax.f32 %v2562, %v2590
      %v2651 = vmax.f32 %v2563, %v2592
      %v2652 = vmax.f32 %v2564, %v2594
      %v2653 = vmax.f32 %v2565, %v2596
      %v2654 = vmax.f32 %v2566, %v2598
      %v2655 = vmax.f32 %v2567, %v2600
      %v2656 = vmax.f32 %v2568, %v2602
      %v2657 = vmax.f32 %v2569, %v2604
      %v2658 = vmax.f32 %v2570, %v2606
      %v2659 = vmax.f32 %v2571, %v2608
      %v2660 = vmax.f32 %v2572, %v2610
      %v2661 = vmax.f32 %v2573, %v2612
      %v2662 = vmax.f32 %v2574, %v2614
      %v2663 = vmax.f32 %v2575, %v2616
      %v2664 = vmax.f32 %v2576, %v2618
      %v2665 = vmax.f32 %v2577, %v2620
      %v2666 = vmax.f32 %v2578, %v2622
      %2667 = vrot.lane.b32.xlu0 %v2504, 108
      %v2668 = vpop.permute.xlu0 %2667
      %2669 = vrot.lane.b32.xlu0 %v2503, 108
      %v2670 = vpop.permute.xlu0 %2669
      %2671 = vrot.lane.b32.xlu0 %v2507, 108
      %v2672 = vpop.permute.xlu0 %2671
      %2673 = vrot.lane.b32.xlu0 %v2506, 108
      %v2674 = vpop.permute.xlu0 %2673
      %2675 = vrot.lane.b32.xlu0 %v2510, 108
      %v2676 = vpop.permute.xlu0 %2675
      %2677 = vrot.lane.b32.xlu0 %v2509, 108
      %v2678 = vpop.permute.xlu0 %2677
      %2679 = vrot.lane.b32.xlu0 %v2513, 108
      %v2680 = vpop.permute.xlu0 %2679
      %2681 = vrot.lane.b32.xlu0 %v2512, 108
      %v2682 = vpop.permute.xlu0 %2681
      %2683 = vrot.lane.b32.xlu0 %v2516, 108
      %v2684 = vpop.permute.xlu0 %2683
      %2685 = vrot.lane.b32.xlu0 %v2515, 108
      %v2686 = vpop.permute.xlu0 %2685
      %2687 = vrot.lane.b32.xlu0 %v2519, 108
      %v2688 = vpop.permute.xlu0 %2687
      %2689 = vrot.lane.b32.xlu0 %v2518, 108
      %v2690 = vpop.permute.xlu0 %2689
      %2691 = vrot.lane.b32.xlu0 %v2522, 108
      %v2692 = vpop.permute.xlu0 %2691
      %2693 = vrot.lane.b32.xlu0 %v2521, 108
      %v2694 = vpop.permute.xlu0 %2693
      %2695 = vrot.lane.b32.xlu0 %v2525, 108
      %v2696 = vpop.permute.xlu0 %2695
      %2697 = vrot.lane.b32.xlu0 %v2524, 108
      %v2698 = vpop.permute.xlu0 %2697
      %2699 = vrot.lane.b32.xlu0 %v2528, 108
      %v2700 = vpop.permute.xlu0 %2699
      %2701 = vrot.lane.b32.xlu0 %v2527, 108
      %v2702 = vpop.permute.xlu0 %2701
      %2703 = vrot.lane.b32.xlu0 %v2531, 108
      %v2704 = vpop.permute.xlu0 %2703
      %2705 = vrot.lane.b32.xlu0 %v2530, 108
      %v2706 = vpop.permute.xlu0 %2705
      %2707 = vrot.lane.b32.xlu0 %v2534, 108
      %v2708 = vpop.permute.xlu0 %2707
      %2709 = vrot.lane.b32.xlu0 %v2533, 108
      %v2710 = vpop.permute.xlu0 %2709
      %v2733 = vmax.f32 %v2645, %v2668
      %v2734 = vmax.f32 %v2646, %v2670
      %v2735 = vmax.f32 %v2647, %v2672
      %v2736 = vmax.f32 %v2648, %v2674
      %v2737 = vmax.f32 %v2649, %v2676
      %v2738 = vmax.f32 %v2650, %v2678
      %v2739 = vmax.f32 %v2651, %v2680
      %v2740 = vmax.f32 %v2652, %v2682
      %v2741 = vmax.f32 %v2653, %v2684
      %v2742 = vmax.f32 %v2654, %v2686
      %v2743 = vmax.f32 %v2655, %v2688
      %v2744 = vmax.f32 %v2656, %v2690
      %v2745 = vmax.f32 %v2657, %v2692
      %v2746 = vmax.f32 %v2658, %v2694
      %v2747 = vmax.f32 %v2659, %v2696
      %v2748 = vmax.f32 %v2660, %v2698
      %v2749 = vmax.f32 %v2661, %v2700
      %v2750 = vmax.f32 %v2662, %v2702
      %v2751 = vmax.f32 %v2663, %v2704
      %v2752 = vmax.f32 %v2664, %v2706
      %v2753 = vmax.f32 %v2665, %v2708
      %v2754 = vmax.f32 %v2666, %v2710
      %v2755 = vrot.slane %v2282, 2
      %v2756 = vrot.slane %v2283, 2
      %v2757 = vsel %vm1643, %v2755, %v2756
      %v2758 = vrot.slane %v2284, 2
      %v2759 = vrot.slane %v2285, 2
      %v2760 = vsel %vm1643, %v2758, %v2759
      %v2761 = vrot.slane %v2286, 2
      %v2762 = vrot.slane %v2287, 2
      %v2763 = vsel %vm1643, %v2761, %v2762
      %v2764 = vrot.slane %v2288, 2
      %v2765 = vrot.slane %v2289, 2
      %v2766 = vsel %vm1643, %v2764, %v2765
      %v2767 = vrot.slane %v2290, 2
      %v2768 = vrot.slane %v2291, 2
      %v2769 = vsel %vm1643, %v2767, %v2768
      %v2770 = vrot.slane %v2292, 2
      %v2771 = vrot.slane %v2293, 2
      %v2772 = vsel %vm1643, %v2770, %v2771
      %v2773 = vrot.slane %v2294, 2
      %v2774 = vrot.slane %v2295, 2
      %v2775 = vsel %vm1643, %v2773, %v2774
      %v2776 = vrot.slane %v2296, 2
      %v2777 = vrot.slane %v2297, 2
      %v2778 = vsel %vm1643, %v2776, %v2777
      %v2779 = vrot.slane %v2298, 2
      %v2780 = vrot.slane %v2299, 2
      %v2781 = vsel %vm1643, %v2779, %v2780
      %v2782 = vrot.slane %v2300, 2
      %v2783 = vrot.slane %v2301, 2
      %v2784 = vsel %vm1643, %v2782, %v2783
      %v2785 = vrot.slane %v2302, 2
      %v2786 = vrot.slane %v2303, 2
      %v2787 = vsel %vm1643, %v2785, %v2786
      %v2810 = vmax.f32 %v2733, %v2757
      %v2811 = vmax.f32 %v2734, %v2756
      %v2812 = vmax.f32 %v2735, %v2760
      %v2813 = vmax.f32 %v2736, %v2759
      %v2814 = vmax.f32 %v2737, %v2763
      %v2815 = vmax.f32 %v2738, %v2762
      %v2816 = vmax.f32 %v2739, %v2766
      %v2817 = vmax.f32 %v2740, %v2765
      %v2818 = vmax.f32 %v2741, %v2769
      %v2819 = vmax.f32 %v2742, %v2768
      %v2820 = vmax.f32 %v2743, %v2772
      %v2821 = vmax.f32 %v2744, %v2771
      %v2822 = vmax.f32 %v2745, %v2775
      %v2823 = vmax.f32 %v2746, %v2774
      %v2824 = vmax.f32 %v2747, %v2778
      %v2825 = vmax.f32 %v2748, %v2777
      %v2826 = vmax.f32 %v2749, %v2781
      %v2827 = vmax.f32 %v2750, %v2780
      %v2828 = vmax.f32 %v2751, %v2784
      %v2829 = vmax.f32 %v2752, %v2783
      %v2830 = vmax.f32 %v2753, %v2787
      %v2831 = vmax.f32 %v2754, %v2786
      %2832 = vrot.lane.b32.xlu0 %v2757, 118
      %v2833 = vpop.permute.xlu0 %2832
      %2834 = vrot.lane.b32.xlu0 %v2756, 118
      %v2835 = vpop.permute.xlu0 %2834
      %2836 = vrot.lane.b32.xlu0 %v2760, 118
      %v2837 = vpop.permute.xlu0 %2836
      %2838 = vrot.lane.b32.xlu0 %v2759, 118
      %v2839 = vpop.permute.xlu0 %2838
      %2840 = vrot.lane.b32.xlu0 %v2763, 118
      %v2841 = vpop.permute.xlu0 %2840
      %2842 = vrot.lane.b32.xlu0 %v2762, 118
      %v2843 = vpop.permute.xlu0 %2842
      %2844 = vrot.lane.b32.xlu0 %v2766, 118
      %v2845 = vpop.permute.xlu0 %2844
      %2846 = vrot.lane.b32.xlu0 %v2765, 118
      %v2847 = vpop.permute.xlu0 %2846
      %2848 = vrot.lane.b32.xlu0 %v2769, 118
      %v2849 = vpop.permute.xlu0 %2848
      %2850 = vrot.lane.b32.xlu0 %v2768, 118
      %v2851 = vpop.permute.xlu0 %2850
      %2852 = vrot.lane.b32.xlu0 %v2772, 118
      %v2853 = vpop.permute.xlu0 %2852
      %2854 = vrot.lane.b32.xlu0 %v2771, 118
      %v2855 = vpop.permute.xlu0 %2854
      %2856 = vrot.lane.b32.xlu0 %v2775, 118
      %v2857 = vpop.permute.xlu0 %2856
      %2858 = vrot.lane.b32.xlu0 %v2774, 118
      %v2859 = vpop.permute.xlu0 %2858
      %2860 = vrot.lane.b32.xlu0 %v2778, 118
      %v2861 = vpop.permute.xlu0 %2860
      %2862 = vrot.lane.b32.xlu0 %v2777, 118
      %v2863 = vpop.permute.xlu0 %2862
      %2864 = vrot.lane.b32.xlu0 %v2781, 118
      %v2865 = vpop.permute.xlu0 %2864
      %2866 = vrot.lane.b32.xlu0 %v2780, 118
      %v2867 = vpop.permute.xlu0 %2866
      %2868 = vrot.lane.b32.xlu0 %v2784, 118
      %v2869 = vpop.permute.xlu0 %2868
      %2870 = vrot.lane.b32.xlu0 %v2783, 118
      %v2871 = vpop.permute.xlu0 %2870
      %2872 = vrot.lane.b32.xlu0 %v2787, 118
      %v2873 = vpop.permute.xlu0 %2872
      %2874 = vrot.lane.b32.xlu0 %v2786, 118
      %v2875 = vpop.permute.xlu0 %2874
      %v2898 = vmax.f32 %v2810, %v2833
      %v2899 = vmax.f32 %v2811, %v2835
      %v2900 = vmax.f32 %v2812, %v2837
      %v2901 = vmax.f32 %v2813, %v2839
      %v2902 = vmax.f32 %v2814, %v2841
      %v2903 = vmax.f32 %v2815, %v2843
      %v2904 = vmax.f32 %v2816, %v2845
      %v2905 = vmax.f32 %v2817, %v2847
      %v2906 = vmax.f32 %v2818, %v2849
      %v2907 = vmax.f32 %v2819, %v2851
      %v2908 = vmax.f32 %v2820, %v2853
      %v2909 = vmax.f32 %v2821, %v2855
      %v2910 = vmax.f32 %v2822, %v2857
      %v2911 = vmax.f32 %v2823, %v2859
      %v2912 = vmax.f32 %v2824, %v2861
      %v2913 = vmax.f32 %v2825, %v2863
      %v2914 = vmax.f32 %v2826, %v2865
      %v2915 = vmax.f32 %v2827, %v2867
      %v2916 = vmax.f32 %v2828, %v2869
      %v2917 = vmax.f32 %v2829, %v2871
      %v2918 = vmax.f32 %v2830, %v2873
      %v2919 = vmax.f32 %v2831, %v2875
      %2920 = vrot.lane.b32.xlu0 %v2757, 108
      %v2921 = vpop.permute.xlu0 %2920
      %2922 = vrot.lane.b32.xlu0 %v2756, 108
      %v2923 = vpop.permute.xlu0 %2922
      %2924 = vrot.lane.b32.xlu0 %v2760, 108
      %v2925 = vpop.permute.xlu0 %2924
      %2926 = vrot.lane.b32.xlu0 %v2759, 108
      %v2927 = vpop.permute.xlu0 %2926
      %2928 = vrot.lane.b32.xlu0 %v2763, 108
      %v2929 = vpop.permute.xlu0 %2928
      %2930 = vrot.lane.b32.xlu0 %v2762, 108
      %v2931 = vpop.permute.xlu0 %2930
      %2932 = vrot.lane.b32.xlu0 %v2766, 108
      %v2933 = vpop.permute.xlu0 %2932
      %2934 = vrot.lane.b32.xlu0 %v2765, 108
      %v2935 = vpop.permute.xlu0 %2934
      %2936 = vrot.lane.b32.xlu0 %v2769, 108
      %v2937 = vpop.permute.xlu0 %2936
      %2938 = vrot.lane.b32.xlu0 %v2768, 108
      %v2939 = vpop.permute.xlu0 %2938
      %2940 = vrot.lane.b32.xlu0 %v2772, 108
      %v2941 = vpop.permute.xlu0 %2940
      %2942 = vrot.lane.b32.xlu0 %v2771, 108
      %v2943 = vpop.permute.xlu0 %2942
      %2944 = vrot.lane.b32.xlu0 %v2775, 108
      %v2945 = vpop.permute.xlu0 %2944
      %2946 = vrot.lane.b32.xlu0 %v2774, 108
      %v2947 = vpop.permute.xlu0 %2946
      %2948 = vrot.lane.b32.xlu0 %v2778, 108
      %v2949 = vpop.permute.xlu0 %2948
      %2950 = vrot.lane.b32.xlu0 %v2777, 108
      %v2951 = vpop.permute.xlu0 %2950
      %2952 = vrot.lane.b32.xlu0 %v2781, 108
      %v2953 = vpop.permute.xlu0 %2952
      %2954 = vrot.lane.b32.xlu0 %v2780, 108
      %v2955 = vpop.permute.xlu0 %2954
      %2956 = vrot.lane.b32.xlu0 %v2784, 108
      %v2957 = vpop.permute.xlu0 %2956
      %2958 = vrot.lane.b32.xlu0 %v2783, 108
      %v2959 = vpop.permute.xlu0 %2958
      %2960 = vrot.lane.b32.xlu0 %v2787, 108
      %v2961 = vpop.permute.xlu0 %2960
      %2962 = vrot.lane.b32.xlu0 %v2786, 108
      %v2963 = vpop.permute.xlu0 %2962
      %v2986 = vmax.f32 %v2898, %v2921
      %v2987 = vmax.f32 %v2899, %v2923
      %v2988 = vmax.f32 %v2900, %v2925
      %v2989 = vmax.f32 %v2901, %v2927
      %v2990 = vmax.f32 %v2902, %v2929
      %v2991 = vmax.f32 %v2903, %v2931
      %v2992 = vmax.f32 %v2904, %v2933
      %v2993 = vmax.f32 %v2905, %v2935
      %v2994 = vmax.f32 %v2906, %v2937
      %v2995 = vmax.f32 %v2907, %v2939
      %v2996 = vmax.f32 %v2908, %v2941
      %v2997 = vmax.f32 %v2909, %v2943
      %v2998 = vmax.f32 %v2910, %v2945
      %v2999 = vmax.f32 %v2911, %v2947
      %v3000 = vmax.f32 %v2912, %v2949
      %v3001 = vmax.f32 %v2913, %v2951
      %v3002 = vmax.f32 %v2914, %v2953
      %v3003 = vmax.f32 %v2915, %v2955
      %v3004 = vmax.f32 %v2916, %v2957
      %v3005 = vmax.f32 %v2917, %v2959
      %v3006 = vmax.f32 %v2918, %v2961
      %v3007 = vmax.f32 %v2919, %v2963
      %vm3008 = vcmp.gt.f32.partialorder %v2986, 0.0
      %vm3009 = vcmp.gt.f32.partialorder %v2987, 0.0
      %vm3010 = vcmp.gt.f32.partialorder %v2988, 0.0
      %vm3011 = vcmp.gt.f32.partialorder %v2989, 0.0
      %vm3012 = vcmp.gt.f32.partialorder %v2990, 0.0
      %vm3013 = vcmp.gt.f32.partialorder %v2991, 0.0
      %vm3014 = vcmp.gt.f32.partialorder %v2992, 0.0
      %vm3015 = vcmp.gt.f32.partialorder %v2993, 0.0
      %vm3016 = vcmp.gt.f32.partialorder %v2994, 0.0
      %vm3017 = vcmp.gt.f32.partialorder %v2995, 0.0
      %vm3018 = vcmp.gt.f32.partialorder %v2996, 0.0
      %vm3019 = vcmp.gt.f32.partialorder %v2997, 0.0
      %vm3020 = vcmp.gt.f32.partialorder %v2998, 0.0
      %vm3021 = vcmp.gt.f32.partialorder %v2999, 0.0
      %vm3022 = vcmp.gt.f32.partialorder %v3000, 0.0
      %vm3023 = vcmp.gt.f32.partialorder %v3001, 0.0
      %vm3024 = vcmp.gt.f32.partialorder %v3002, 0.0
      %vm3025 = vcmp.gt.f32.partialorder %v3003, 0.0
      %vm3026 = vcmp.gt.f32.partialorder %v3004, 0.0
      %vm3027 = vcmp.gt.f32.partialorder %v3005, 0.0
      %vm3028 = vcmp.gt.f32.partialorder %v3006, 0.0
      %vm3029 = vcmp.gt.f32.partialorder %v3007, 0.0
      %v3030 = vmul.f32 %v2986, -2.8388
      %v3031 = vmul.f32 %v2987, -2.8388
      %v3032 = vmul.f32 %v2988, -2.8388
      %v3033 = vmul.f32 %v2989, -2.8388
      %v3034 = vmul.f32 %v2990, -2.8388
      %v3035 = vmul.f32 %v2991, -2.8388
      %v3036 = vmul.f32 %v2992, -2.8388
      %v3037 = vmul.f32 %v2993, -2.8388
      %v3038 = vmul.f32 %v2994, -2.8388
      %v3039 = vmul.f32 %v2995, -2.8388
      %v3040 = vmul.f32 %v2996, -2.8388
      %v3041 = vmul.f32 %v2997, -2.8388
      %v3042 = vmul.f32 %v2998, -2.8388
      %v3043 = vmul.f32 %v2999, -2.8388
      %v3044 = vmul.f32 %v3000, -2.8388
      %v3045 = vmul.f32 %v3001, -2.8388
      %v3046 = vmul.f32 %v3002, -2.8388
      %v3047 = vmul.f32 %v3003, -2.8388
      %v3048 = vmul.f32 %v3004, -2.8388
      %v3049 = vmul.f32 %v3005, -2.8388
      %v3050 = vmul.f32 %v3006, -2.8388
      %v3051 = vmul.f32 %v3007, -2.8388
      %v3052 = vsel %vm3008, %v2986, %v3030
      %v3053 = vsel %vm3009, %v2987, %v3031
      %v3054 = vsel %vm3010, %v2988, %v3032
      %v3055 = vsel %vm3011, %v2989, %v3033
      %v3056 = vsel %vm3012, %v2990, %v3034
      %v3057 = vsel %vm3013, %v2991, %v3035
      %v3058 = vsel %vm3014, %v2992, %v3036
      %v3059 = vsel %vm3015, %v2993, %v3037
      %v3060 = vsel %vm3016, %v2994, %v3038
      %v3061 = vsel %vm3017, %v2995, %v3039
      %v3062 = vsel %vm3018, %v2996, %v3040
      %v3063 = vsel %vm3019, %v2997, %v3041
      %v3064 = vsel %vm3020, %v2998, %v3042
      %v3065 = vsel %vm3021, %v2999, %v3043
      %v3066 = vsel %vm3022, %v3000, %v3044
      %v3067 = vsel %vm3023, %v3001, %v3045
      %v3068 = vsel %vm3024, %v3002, %v3046
      %v3069 = vsel %vm3025, %v3003, %v3047
      %v3070 = vsel %vm3026, %v3004, %v3048
      %v3071 = vsel %vm3027, %v3005, %v3049
      %v3072 = vsel %vm3028, %v3006, %v3050
      %v3073 = vsel %vm3029, %v3007, %v3051
      %vm3074 = vcmask 818176
      %3075 = vst.msk [vmem:[%s177] sm:$0xff] %vm3074, %v3052
      %vm3076 = vcmask 812032
      %3077 = vst.msk [vmem:[%s177 + $0x8] sm:$0x3] %vm3076, %v3053
      %3078 = vst.msk [vmem:[%s177 + $0x10] sm:$0xff] %vm3074, %v3054
      %3079 = vst.msk [vmem:[%s177 + $0x18] sm:$0x3] %vm3076, %v3055
      %3080 = vst.msk [vmem:[%s177 + $0x20] sm:$0xff] %vm3074, %v3056
      %3081 = vst.msk [vmem:[%s177 + $0x28] sm:$0x3] %vm3076, %v3057
      %3082 = vst.msk [vmem:[%s177 + $0x30] sm:$0xff] %vm3074, %v3058
      %3083 = vst.msk [vmem:[%s177 + $0x38] sm:$0x3] %vm3076, %v3059
      %3084 = vst.msk [vmem:[%s177 + $0x40] sm:$0xff] %vm3074, %v3060
      %3085 = vst.msk [vmem:[%s177 + $0x48] sm:$0x3] %vm3076, %v3061
      %3086 = vst.msk [vmem:[%s177 + $0x50] sm:$0xff] %vm3074, %v3062
      %3087 = vst.msk [vmem:[%s177 + $0x58] sm:$0x3] %vm3076, %v3063
      %3088 = vst.msk [vmem:[%s177 + $0x60] sm:$0xff] %vm3074, %v3064
      %3089 = vst.msk [vmem:[%s177 + $0x68] sm:$0x3] %vm3076, %v3065
      %3090 = vst.msk [vmem:[%s177 + $0x70] sm:$0xff] %vm3074, %v3066
      %3091 = vst.msk [vmem:[%s177 + $0x78] sm:$0x3] %vm3076, %v3067
      %3092 = vst.msk [vmem:[%s177 + $0x80] sm:$0xff] %vm3074, %v3068
      %3093 = vst.msk [vmem:[%s177 + $0x88] sm:$0x3] %vm3076, %v3069
      %3094 = vst.msk [vmem:[%s177 + $0x90] sm:$0xff] %vm3074, %v3070
      %3095 = vst.msk [vmem:[%s177 + $0x98] sm:$0x3] %vm3076, %v3071
      %3096 = vst.msk [vmem:[%s177 + $0xa0] sm:$0xff] %vm3074, %v3072
      %3097 = vst.msk [vmem:[%s177 + $0xa8] sm:$0x3] %vm3076, %v3073
      %s3098 = smul.u32 11, %s14
      %p3099 = scmp.lt.s32.totalorder %s3098, 21
      %s3100 = scalar_select %p3099, %s3098, 21
      %s3101 = smul.addr %s3100, 2
      %s3102 = smul.addr %s3101, 8
      %s3103 = scalar_lea.vmem %s3, %s3102
      // Predicated region
      $region33: #{model_forward.1} parent=31 // pred_check
        %p3104 = pneg %p100
      $region34: #{model_forward.1} parent=31 // pred_check_branch
        %3106 = sbr.rel (%p3104) target = $region36
      $region35: #{model_forward.1} parent=31 // pred_region
        %s3107 = smul.u32 11, %s14
      $region36: #{model_forward.1} parent=31 // pred_fallthru
        _
    $region32: #{model_forward.1} parent=5 // pred_fallthru
      _
    %p3108 = scmp.le.s32.totalorder 2, %s9
    // Predicated region
    $region37: #{model_forward.1} parent=5 // pred_check
      %p3109 = pneg %p3108
    $region38: #{model_forward.1} parent=5 // pred_check_branch
      %3111 = sbr.rel (%p3109) target = $region40
    $region39: #{model_forward.1} parent=5 // pred_region
      %s3112 = ssub.s32 %s9, 2
      // Predicated region
      $region41: #{model_forward.1} parent=39 // pred_check
        %p3113 = pneg %p106
      $region42: #{model_forward.1} parent=39 // pred_check_branch
        %3115 = sbr.rel (%p3113) target = $region44
      $region43: #{model_forward.1} parent=39 // pred_region
        %s3116 = smul.u32 11, %s15
        %p3117 = scmp.lt.s32.totalorder %s3116, 21
        %s3118 = scalar_select %p3117, %s3116, 21
        %s3119 = smul.addr %s3118, 2
        %s3120 = smul.addr %s3119, 8
        %s3121 = scalar_lea.vmem %s3, %s3120
      $region44: #{model_forward.1} parent=39 // pred_fallthru
        _
    $region40: #{model_forward.1} parent=5 // pred_fallthru
      _
  $region6: #{model_forward.1} parent=0 // loop_footer
    %s13 = sadd.s32 1, %s9
  $region7: #{model_forward.1} parent=0 // loop_footer_branch
    %8 = sbr.rel target = $region3
  $region8: #{model_forward.1} parent=0 // loop_exit
    _

</llo_original>
